<compile_context>
chip_gen: v7x
topology: tpu7x:2x2x1
jax: 0.10.0
libtpu: 0.0.40
codegen_flags: <defaults>
</compile_context>

<pallas_src>
import functools
import math

import numpy as np
import jax
import jax.numpy as jnp
from jax import lax
from jax.experimental import pallas as pl
from jax.experimental.pallas import tpu as pltpu


def _spatial_conv_masks(H, W):
    """(49, H*W) 0/1 masks: tap (kh, kw) contributes only where the shifted position
    stays inside the (H, W) map (implements the 7x7 conv's zero padding)."""
    p = np.arange(H * W)
    i, j = p // W, p % W
    masks = np.empty((49, H * W), np.float32)
    for kh in range(7):
        for kw in range(7):
            dh, dw = kh - 3, kw - 3
            ok = (i + dh >= 0) & (i + dh < H) & (j + dw >= 0) & (j + dw < W)
            masks[kh * 7 + kw] = ok.astype(np.float32)
    return masks


def _cbam_kernel(x_ref, w1_ref, w2_ref, wc_ref, masks_ref, o_ref, *, H, W, tanh_act):
    nb, C, HW = x_ref.shape

    def act(z):
        return jnp.tanh(z) + 1.0 if tanh_act else jax.nn.sigmoid(z)

    for b in range(nb):                         # nb is small & static -> unrolled
        xb = x_ref[b].astype(jnp.float32)       # (C, HW), lane-dense

        # ---------------- channel attention ----------------
        avg = jnp.mean(xb, axis=1, keepdims=True)          # (C, 1) global avg pool
        mxv = jnp.max(xb, axis=1, keepdims=True)           # (C, 1) global max pool
        v = jnp.concatenate([avg, mxv], axis=1)            # (C, 2)
        h = jnp.dot(w1_ref[...], v, preferred_element_type=jnp.float32)   # (Cr, 2)
        h = jnp.maximum(h, 0.0)
        y = jnp.dot(w2_ref[...], h, preferred_element_type=jnp.float32)   # (C, 2)
        merge = y[:, 0:1] + y[:, 1:2]                      # (C, 1)
        mc = act(merge)
        xc = xb * mc                                       # (C, HW) channel-scaled

        # ---------------- spatial attention ----------------
        sm = jnp.mean(xc, axis=0, keepdims=True)           # (1, HW) channel mean
        sx = jnp.max(xc, axis=0, keepdims=True)            # (1, HW) channel max

        # 7x7 conv on the flat map: per tap, weighted combine (scalars from SMEM),
        # one static lane-roll by the flat offset, then mask out-of-bounds positions.
        acc = None
        for kh in range(7):
            dh = kh - 3
            for kw in range(7):
                dw = kw - 3
                t = kh * 7 + kw
                tap = wc_ref[0, t] * sm + wc_ref[1, t] * sx          # (1, HW)
                off = dh * W + dw
                if off != 0:
                    tap = pltpu.roll(tap, shift=(-off) % HW, axis=1)
                tap = tap * masks_ref[t:t + 1, :]
                acc = tap if acc is None else acc + tap
        ms = act(acc)                                      # (1, HW)

        o_ref[b] = (xc * ms).astype(o_ref.dtype)           # lane-dense unmasked store


def _pick_batch_block(N, C, HW, itemsize, budget=1 << 20, cap=8):
    per = max(1, C * HW * itemsize)
    nb = max(1, min(N, cap, budget // per))
    # keep at least 2 grid steps when possible (pipelining / megacore)
    while nb > 1 and (N % nb != 0 or (N // nb) < 2):
        nb -= 1
    return nb


def cbam_combine(x, w1, w2, wconv, *, tanh_act=False, batch_block=None):
    """x: (N, C, H, W); w1: (C//r, C); w2: (C, C//r); wconv: (2, 7, 7)."""
    N, C, H, W = x.shape
    Cr = w1.shape[0]
    HW = H * W

    x2 = x.reshape(N, C, HW)                         # lane-dense view (free: NCHW contiguous)
    wc = wconv.reshape(2, 49).astype(jnp.float32)    # scalar tap table -> SMEM
    masks = jnp.asarray(_spatial_conv_masks(H, W))   # (49, HW) conv boundary masks

    nb = batch_block if batch_block is not None else _pick_batch_block(
        N, C, HW, x.dtype.itemsize)
    assert N % nb == 0, (N, nb)
    grid = (N // nb,)

    kernel = functools.partial(_cbam_kernel, H=H, W=W, tanh_act=tanh_act)
    out = pl.pallas_call(
        kernel,
        out_shape=jax.ShapeDtypeStruct((N, C, HW), x.dtype),
        grid=grid,
        in_specs=[
            pl.BlockSpec((nb, C, HW), lambda n: (n, 0, 0)),        # x block (lane-dense)
            pl.BlockSpec((Cr, C), lambda n: (0, 0)),               # fc1 weight (1x1 conv)
            pl.BlockSpec((C, Cr), lambda n: (0, 0)),               # fc2 weight (1x1 conv)
            pl.BlockSpec(memory_space=pltpu.MemorySpace.SMEM),     # 7x7 taps as SMEM scalars
            pl.BlockSpec((49, HW), lambda n: (0, 0)),              # boundary masks
        ],
        out_specs=pl.BlockSpec((nb, C, HW), lambda n: (n, 0, 0)),
        compiler_params=pltpu.CompilerParams(
            dimension_semantics=("parallel",),                     # batch axis -> megacore on v7x
        ),
    )(x2, w1, w2, wc, masks)
    return out.reshape(N, C, H, W)


# ---------------- pure-JAX reference (correctness check only) ----------------
def cbam_ref(x, w1, w2, wconv, tanh_act):
    avg = jnp.mean(x, axis=(2, 3), keepdims=True)
    mx = jnp.max(x, axis=(2, 3), keepdims=True)

    def mlp(v):
        h = jnp.einsum("rc,ncij->nrij", w1, v)
        h = jnp.maximum(h, 0.0)
        return jnp.einsum("cr,nrij->ncij", w2, h)

    merge = mlp(avg) + mlp(mx)
    mc = jnp.tanh(merge) + 1.0 if tanh_act else jax.nn.sigmoid(merge)
    xc = x * mc

    sm = jnp.mean(xc, axis=1, keepdims=True)
    sx = jnp.max(xc, axis=1, keepdims=True)
    cat = jnp.concatenate([sm, sx], axis=1)
    conv = lax.conv_general_dilated(
        cat, wconv[None], window_strides=(1, 1), padding=[(3, 3), (3, 3)],
        dimension_numbers=("NCHW", "OIHW", "NCHW"))
    ms = jnp.tanh(conv) + 1.0 if tanh_act else jax.nn.sigmoid(conv)
    return xc * ms


def xavier_uniform(key, shape, fan_in, fan_out):
    bound = math.sqrt(6.0 / (fan_in + fan_out))
    return jax.random.uniform(key, shape, jnp.float32, -bound, bound)


if __name__ == "__main__":
    key = jax.random.PRNGKey(0)
    kx, k1, k2, k3 = jax.random.split(key, 4)

    N, C, H, W = 2, 8, 16, 16
    reduction = 2
    Cr = C // reduction

    x = jax.random.normal(kx, (N, C, H, W), jnp.float32)
    # fc1: Conv2d(C, C//r, 1) weight (C//r, C, 1, 1) -> stored as (C//r, C)
    w1 = xavier_uniform(k1, (Cr, C), fan_in=C, fan_out=Cr)
    # fc2: Conv2d(C//r, C, 1) weight (C, C//r, 1, 1) -> stored as (C, C//r)
    w2 = xavier_uniform(k2, (C, Cr), fan_in=Cr, fan_out=C)
    # spatial conv: Conv2d(2, 1, 7, padding=3) weight (1, 2, 7, 7) -> stored as (2, 7, 7)
    wconv = xavier_uniform(k3, (2, 7, 7), fan_in=2 * 49, fan_out=1 * 49)

    for tanh_act in (False, True):
        out = jax.block_until_ready(cbam_combine(x, w1, w2, wconv, tanh_act=tanh_act))
        ref = cbam_ref(x, w1, w2, wconv, tanh_act)
        assert out.shape == x.shape and out.dtype == x.dtype
        err = float(jnp.max(jnp.abs(out - ref)))
        assert err < 2e-4, err
    print("KERNEL_OK")
</pallas_src>

<mosaic_0001>
module attributes {stable_mosaic.version = 11 : i64} {
  func.func @_cbam_kernel(%arg0: i32, %arg1: memref<1x8x256xf32, #tpu.memory_space<vmem>>, %arg2: memref<4x8xf32, #tpu.memory_space<vmem>>, %arg3: memref<8x4xf32, #tpu.memory_space<vmem>>, %arg4: memref<2x49xf32, #tpu.memory_space<smem>>, %arg5: memref<49x256xf32, #tpu.memory_space<vmem>>, %arg6: memref<1x8x256xf32, #tpu.memory_space<vmem>>) attributes {dimension_semantics = [#tpu.dimension_semantics<parallel>], iteration_bounds = array<i64: 2>, scalar_prefetch = 0 : i64, scratch_operands = 0 : i64, tpu.core_type = #tpu.core_type<tc>, window_params = [{transform_indices = @transform_0, window_bounds = array<i64: 1, 8, 256>}, {pipeline_mode = #tpu.pipeline_mode<synchronous>, transform_indices = @transform_1, window_bounds = array<i64: 4, 8>}, {pipeline_mode = #tpu.pipeline_mode<synchronous>, transform_indices = @transform_2, window_bounds = array<i64: 8, 4>}, {transform_indices = @transform_3, window_bounds = array<i64: 2, 49>}, {pipeline_mode = #tpu.pipeline_mode<synchronous>, transform_indices = @transform_4, window_bounds = array<i64: 49, 256>}, {transform_indices = @transform_5, window_bounds = array<i64: 1, 8, 256>}]} {
    %c0 = arith.constant 0 : index
    %c0_0 = arith.constant 0 : index
    %c0_1 = arith.constant 0 : index
    %0 = vector.load %arg1[%c0, %c0_0, %c0_1] : memref<1x8x256xf32, #tpu.memory_space<vmem>>, vector<1x8x256xf32>
    %1 = vector.shape_cast %0 : vector<1x8x256xf32> to vector<8x256xf32>
    %cst = arith.constant dense<0.000000e+00> : vector<8xf32>
    %2 = vector.multi_reduction <add>, %1, %cst [1] : vector<8x256xf32> to vector<8xf32>
    %3 = vector.shape_cast %2 : vector<8xf32> to vector<8x1xf32>
    %cst_2 = arith.constant 2.560000e+02 : f32
    %4 = vector.broadcast %cst_2 : f32 to vector<8x1xf32>
    %5 = arith.divf %3, %4 : vector<8x1xf32>
    %cst_3 = arith.constant dense<0xFF800000> : vector<8xf32>
    %6 = vector.multi_reduction <maximumf>, %1, %cst_3 [1] : vector<8x256xf32> to vector<8xf32>
    %7 = vector.shape_cast %6 : vector<8xf32> to vector<8x1xf32>
    %8 = tpu.concatenate %5, %7 in 1 : vector<8x1xf32>, vector<8x1xf32> -> vector<8x2xf32>
    %c0_4 = arith.constant 0 : index
    %c0_5 = arith.constant 0 : index
    %9 = vector.load %arg2[%c0_4, %c0_5] : memref<4x8xf32, #tpu.memory_space<vmem>>, vector<4x8xf32>
    %cst_6 = arith.constant dense<0.000000e+00> : vector<4x2xf32>
    %10 = tpu.matmul %9, %8, %cst_6 {dimension_numbers = #tpu.dot_dimension_numbers<[1], [0], [0], [1], [0, 0, 1, 1], [], []>} : vector<4x8xf32>, vector<8x2xf32>, vector<4x2xf32> -> vector<4x2xf32>
    %cst_7 = arith.constant 0.000000e+00 : f32
    %11 = vector.broadcast %cst_7 : f32 to vector<4x2xf32>
    %12 = arith.maximumf %10, %11 : vector<4x2xf32>
    %c0_8 = arith.constant 0 : index
    %c0_9 = arith.constant 0 : index
    %13 = vector.load %arg3[%c0_8, %c0_9] : memref<8x4xf32, #tpu.memory_space<vmem>>, vector<8x4xf32>
    %cst_10 = arith.constant dense<0.000000e+00> : vector<8x2xf32>
    %14 = tpu.matmul %13, %12, %cst_10 {dimension_numbers = #tpu.dot_dimension_numbers<[1], [0], [0], [1], [0, 0, 1, 1], [], []>} : vector<8x4xf32>, vector<4x2xf32>, vector<8x2xf32> -> vector<8x2xf32>
    %15 = vector.extract_strided_slice %14 {offsets = [0, 0], sizes = [8, 1], strides = [1, 1]} : vector<8x2xf32> to vector<8x1xf32>
    %16 = vector.extract_strided_slice %14 {offsets = [0, 1], sizes = [8, 1], strides = [1, 1]} : vector<8x2xf32> to vector<8x1xf32>
    %17 = arith.addf %15, %16 : vector<8x1xf32>
    %18 = arith.negf %17 : vector<8x1xf32>
    %19 = math.exp %18 : vector<8x1xf32>
    %cst_11 = arith.constant 1.000000e+00 : f32
    %20 = vector.broadcast %cst_11 : f32 to vector<8x1xf32>
    %21 = arith.addf %20, %19 : vector<8x1xf32>
    %22 = arith.divf %20, %21 : vector<8x1xf32>
    %23 = vector.broadcast %22 : vector<8x1xf32> to vector<8x256xf32>
    %24 = arith.mulf %1, %23 : vector<8x256xf32>
    %cst_12 = arith.constant dense<0.000000e+00> : vector<256xf32>
    %25 = vector.multi_reduction <add>, %24, %cst_12 [0] : vector<8x256xf32> to vector<256xf32>
    %26 = vector.shape_cast %25 : vector<256xf32> to vector<1x256xf32>
    %cst_13 = arith.constant 8.000000e+00 : f32
    %27 = vector.broadcast %cst_13 : f32 to vector<1x256xf32>
    %28 = arith.divf %26, %27 : vector<1x256xf32>
    %cst_14 = arith.constant dense<0xFF800000> : vector<256xf32>
    %29 = vector.multi_reduction <maximumf>, %24, %cst_14 [0] : vector<8x256xf32> to vector<256xf32>
    %30 = vector.shape_cast %29 : vector<256xf32> to vector<1x256xf32>
    %c0_15 = arith.constant 0 : index
    %c0_16 = arith.constant 0 : index
    %31 = memref.load %arg4[%c0_15, %c0_16] : memref<2x49xf32, #tpu.memory_space<smem>>
    %32 = vector.broadcast %31 : f32 to vector<1x256xf32>
    %33 = arith.mulf %32, %28 : vector<1x256xf32>
    %c1 = arith.constant 1 : index
    %c0_17 = arith.constant 0 : index
    %34 = memref.load %arg4[%c1, %c0_17] : memref<2x49xf32, #tpu.memory_space<smem>>
    %35 = vector.broadcast %34 : f32 to vector<1x256xf32>
    %36 = arith.mulf %35, %30 : vector<1x256xf32>
    %37 = arith.addf %33, %36 : vector<1x256xf32>
    %c51_i32 = arith.constant 51 : i32
    %38 = tpu.dynamic_rotate %37 by %c51_i32 dim 1 : vector<1x256xf32>, i32 -> vector<1x256xf32>
    %c0_18 = arith.constant 0 : index
    %c0_19 = arith.constant 0 : index
    %39 = vector.load %arg5[%c0_18, %c0_19] : memref<49x256xf32, #tpu.memory_space<vmem>>, vector<1x256xf32>
    %40 = arith.mulf %38, %39 : vector<1x256xf32>
    %c0_20 = arith.constant 0 : index
    %c1_21 = arith.constant 1 : index
    %41 = memref.load %arg4[%c0_20, %c1_21] : memref<2x49xf32, #tpu.memory_space<smem>>
    %42 = vector.broadcast %41 : f32 to vector<1x256xf32>
    %43 = arith.mulf %42, %28 : vector<1x256xf32>
    %c1_22 = arith.constant 1 : index
    %c1_23 = arith.constant 1 : index
    %44 = memref.load %arg4[%c1_22, %c1_23] : memref<2x49xf32, #tpu.memory_space<smem>>
    %45 = vector.broadcast %44 : f32 to vector<1x256xf32>
    %46 = arith.mulf %45, %30 : vector<1x256xf32>
    %47 = arith.addf %43, %46 : vector<1x256xf32>
    %c50_i32 = arith.constant 50 : i32
    %48 = tpu.dynamic_rotate %47 by %c50_i32 dim 1 : vector<1x256xf32>, i32 -> vector<1x256xf32>
    %c1_24 = arith.constant 1 : index
    %c0_25 = arith.constant 0 : index
    %49 = vector.load %arg5[%c1_24, %c0_25] : memref<49x256xf32, #tpu.memory_space<vmem>>, vector<1x256xf32>
    %50 = arith.mulf %48, %49 : vector<1x256xf32>
    %51 = arith.addf %40, %50 : vector<1x256xf32>
    %c0_26 = arith.constant 0 : index
    %c2 = arith.constant 2 : index
    %52 = memref.load %arg4[%c0_26, %c2] : memref<2x49xf32, #tpu.memory_space<smem>>
    %53 = vector.broadcast %52 : f32 to vector<1x256xf32>
    %54 = arith.mulf %53, %28 : vector<1x256xf32>
    %c1_27 = arith.constant 1 : index
    %c2_28 = arith.constant 2 : index
    %55 = memref.load %arg4[%c1_27, %c2_28] : memref<2x49xf32, #tpu.memory_space<smem>>
    %56 = vector.broadcast %55 : f32 to vector<1x256xf32>
    %57 = arith.mulf %56, %30 : vector<1x256xf32>
    %58 = arith.addf %54, %57 : vector<1x256xf32>
    %c49_i32 = arith.constant 49 : i32
    %59 = tpu.dynamic_rotate %58 by %c49_i32 dim 1 : vector<1x256xf32>, i32 -> vector<1x256xf32>
    %c2_29 = arith.constant 2 : index
    %c0_30 = arith.constant 0 : index
    %60 = vector.load %arg5[%c2_29, %c0_30] : memref<49x256xf32, #tpu.memory_space<vmem>>, vector<1x256xf32>
    %61 = arith.mulf %59, %60 : vector<1x256xf32>
    %62 = arith.addf %51, %61 : vector<1x256xf32>
    %c0_31 = arith.constant 0 : index
    %c3 = arith.constant 3 : index
    %63 = memref.load %arg4[%c0_31, %c3] : memref<2x49xf32, #tpu.memory_space<smem>>
    %64 = vector.broadcast %63 : f32 to vector<1x256xf32>
    %65 = arith.mulf %64, %28 : vector<1x256xf32>
    %c1_32 = arith.constant 1 : index
    %c3_33 = arith.constant 3 : index
    %66 = memref.load %arg4[%c1_32, %c3_33] : memref<2x49xf32, #tpu.memory_space<smem>>
    %67 = vector.broadcast %66 : f32 to vector<1x256xf32>
    %68 = arith.mulf %67, %30 : vector<1x256xf32>
    %69 = arith.addf %65, %68 : vector<1x256xf32>
    %c48_i32 = arith.constant 48 : i32
    %70 = tpu.dynamic_rotate %69 by %c48_i32 dim 1 : vector<1x256xf32>, i32 -> vector<1x256xf32>
    %c3_34 = arith.constant 3 : index
    %c0_35 = arith.constant 0 : index
    %71 = vector.load %arg5[%c3_34, %c0_35] : memref<49x256xf32, #tpu.memory_space<vmem>>, vector<1x256xf32>
    %72 = arith.mulf %70, %71 : vector<1x256xf32>
    %73 = arith.addf %62, %72 : vector<1x256xf32>
    %c0_36 = arith.constant 0 : index
    %c4 = arith.constant 4 : index
    %74 = memref.load %arg4[%c0_36, %c4] : memref<2x49xf32, #tpu.memory_space<smem>>
    %75 = vector.broadcast %74 : f32 to vector<1x256xf32>
    %76 = arith.mulf %75, %28 : vector<1x256xf32>
    %c1_37 = arith.constant 1 : index
    %c4_38 = arith.constant 4 : index
    %77 = memref.load %arg4[%c1_37, %c4_38] : memref<2x49xf32, #tpu.memory_space<smem>>
    %78 = vector.broadcast %77 : f32 to vector<1x256xf32>
    %79 = arith.mulf %78, %30 : vector<1x256xf32>
    %80 = arith.addf %76, %79 : vector<1x256xf32>
    %c47_i32 = arith.constant 47 : i32
    %81 = tpu.dynamic_rotate %80 by %c47_i32 dim 1 : vector<1x256xf32>, i32 -> vector<1x256xf32>
    %c4_39 = arith.constant 4 : index
    %c0_40 = arith.constant 0 : index
    %82 = vector.load %arg5[%c4_39, %c0_40] : memref<49x256xf32, #tpu.memory_space<vmem>>, vector<1x256xf32>
    %83 = arith.mulf %81, %82 : vector<1x256xf32>
    %84 = arith.addf %73, %83 : vector<1x256xf32>
    %c0_41 = arith.constant 0 : index
    %c5 = arith.constant 5 : index
    %85 = memref.load %arg4[%c0_41, %c5] : memref<2x49xf32, #tpu.memory_space<smem>>
    %86 = vector.broadcast %85 : f32 to vector<1x256xf32>
    %87 = arith.mulf %86, %28 : vector<1x256xf32>
    %c1_42 = arith.constant 1 : index
    %c5_43 = arith.constant 5 : index
    %88 = memref.load %arg4[%c1_42, %c5_43] : memref<2x49xf32, #tpu.memory_space<smem>>
    %89 = vector.broadcast %88 : f32 to vector<1x256xf32>
    %90 = arith.mulf %89, %30 : vector<1x256xf32>
    %91 = arith.addf %87, %90 : vector<1x256xf32>
    %c46_i32 = arith.constant 46 : i32
    %92 = tpu.dynamic_rotate %91 by %c46_i32 dim 1 : vector<1x256xf32>, i32 -> vector<1x256xf32>
    %c5_44 = arith.constant 5 : index
    %c0_45 = arith.constant 0 : index
    %93 = vector.load %arg5[%c5_44, %c0_45] : memref<49x256xf32, #tpu.memory_space<vmem>>, vector<1x256xf32>
    %94 = arith.mulf %92, %93 : vector<1x256xf32>
    %95 = arith.addf %84, %94 : vector<1x256xf32>
    %c0_46 = arith.constant 0 : index
    %c6 = arith.constant 6 : index
    %96 = memref.load %arg4[%c0_46, %c6] : memref<2x49xf32, #tpu.memory_space<smem>>
    %97 = vector.broadcast %96 : f32 to vector<1x256xf32>
    %98 = arith.mulf %97, %28 : vector<1x256xf32>
    %c1_47 = arith.constant 1 : index
    %c6_48 = arith.constant 6 : index
    %99 = memref.load %arg4[%c1_47, %c6_48] : memref<2x49xf32, #tpu.memory_space<smem>>
    %100 = vector.broadcast %99 : f32 to vector<1x256xf32>
    %101 = arith.mulf %100, %30 : vector<1x256xf32>
    %102 = arith.addf %98, %101 : vector<1x256xf32>
    %c45_i32 = arith.constant 45 : i32
    %103 = tpu.dynamic_rotate %102 by %c45_i32 dim 1 : vector<1x256xf32>, i32 -> vector<1x256xf32>
    %c6_49 = arith.constant 6 : index
    %c0_50 = arith.constant 0 : index
    %104 = vector.load %arg5[%c6_49, %c0_50] : memref<49x256xf32, #tpu.memory_space<vmem>>, vector<1x256xf32>
    %105 = arith.mulf %103, %104 : vector<1x256xf32>
    %106 = arith.addf %95, %105 : vector<1x256xf32>
    %c0_51 = arith.constant 0 : index
    %c7 = arith.constant 7 : index
    %107 = memref.load %arg4[%c0_51, %c7] : memref<2x49xf32, #tpu.memory_space<smem>>
    %108 = vector.broadcast %107 : f32 to vector<1x256xf32>
    %109 = arith.mulf %108, %28 : vector<1x256xf32>
    %c1_52 = arith.constant 1 : index
    %c7_53 = arith.constant 7 : index
    %110 = memref.load %arg4[%c1_52, %c7_53] : memref<2x49xf32, #tpu.memory_space<smem>>
    %111 = vector.broadcast %110 : f32 to vector<1x256xf32>
    %112 = arith.mulf %111, %30 : vector<1x256xf32>
    %113 = arith.addf %109, %112 : vector<1x256xf32>
    %c35_i32 = arith.constant 35 : i32
    %114 = tpu.dynamic_rotate %113 by %c35_i32 dim 1 : vector<1x256xf32>, i32 -> vector<1x256xf32>
    %c7_54 = arith.constant 7 : index
    %c0_55 = arith.constant 0 : index
    %115 = vector.load %arg5[%c7_54, %c0_55] : memref<49x256xf32, #tpu.memory_space<vmem>>, vector<1x256xf32>
    %116 = arith.mulf %114, %115 : vector<1x256xf32>
    %117 = arith.addf %106, %116 : vector<1x256xf32>
    %c0_56 = arith.constant 0 : index
    %c8 = arith.constant 8 : index
    %118 = memref.load %arg4[%c0_56, %c8] : memref<2x49xf32, #tpu.memory_space<smem>>
    %119 = vector.broadcast %118 : f32 to vector<1x256xf32>
    %120 = arith.mulf %119, %28 : vector<1x256xf32>
    %c1_57 = arith.constant 1 : index
    %c8_58 = arith.constant 8 : index
    %121 = memref.load %arg4[%c1_57, %c8_58] : memref<2x49xf32, #tpu.memory_space<smem>>
    %122 = vector.broadcast %121 : f32 to vector<1x256xf32>
    %123 = arith.mulf %122, %30 : vector<1x256xf32>
    %124 = arith.addf %120, %123 : vector<1x256xf32>
    %c34_i32 = arith.constant 34 : i32
    %125 = tpu.dynamic_rotate %124 by %c34_i32 dim 1 : vector<1x256xf32>, i32 -> vector<1x256xf32>
    %c8_59 = arith.constant 8 : index
    %c0_60 = arith.constant 0 : index
    %126 = vector.load %arg5[%c8_59, %c0_60] : memref<49x256xf32, #tpu.memory_space<vmem>>, vector<1x256xf32>
    %127 = arith.mulf %125, %126 : vector<1x256xf32>
    %128 = arith.addf %117, %127 : vector<1x256xf32>
    %c0_61 = arith.constant 0 : index
    %c9 = arith.constant 9 : index
    %129 = memref.load %arg4[%c0_61, %c9] : memref<2x49xf32, #tpu.memory_space<smem>>
    %130 = vector.broadcast %129 : f32 to vector<1x256xf32>
    %131 = arith.mulf %130, %28 : vector<1x256xf32>
    %c1_62 = arith.constant 1 : index
    %c9_63 = arith.constant 9 : index
    %132 = memref.load %arg4[%c1_62, %c9_63] : memref<2x49xf32, #tpu.memory_space<smem>>
    %133 = vector.broadcast %132 : f32 to vector<1x256xf32>
    %134 = arith.mulf %133, %30 : vector<1x256xf32>
    %135 = arith.addf %131, %134 : vector<1x256xf32>
    %c33_i32 = arith.constant 33 : i32
    %136 = tpu.dynamic_rotate %135 by %c33_i32 dim 1 : vector<1x256xf32>, i32 -> vector<1x256xf32>
    %c9_64 = arith.constant 9 : index
    %c0_65 = arith.constant 0 : index
    %137 = vector.load %arg5[%c9_64, %c0_65] : memref<49x256xf32, #tpu.memory_space<vmem>>, vector<1x256xf32>
    %138 = arith.mulf %136, %137 : vector<1x256xf32>
    %139 = arith.addf %128, %138 : vector<1x256xf32>
    %c0_66 = arith.constant 0 : index
    %c10 = arith.constant 10 : index
    %140 = memref.load %arg4[%c0_66, %c10] : memref<2x49xf32, #tpu.memory_space<smem>>
    %141 = vector.broadcast %140 : f32 to vector<1x256xf32>
    %142 = arith.mulf %141, %28 : vector<1x256xf32>
    %c1_67 = arith.constant 1 : index
    %c10_68 = arith.constant 10 : index
    %143 = memref.load %arg4[%c1_67, %c10_68] : memref<2x49xf32, #tpu.memory_space<smem>>
    %144 = vector.broadcast %143 : f32 to vector<1x256xf32>
    %145 = arith.mulf %144, %30 : vector<1x256xf32>
    %146 = arith.addf %142, %145 : vector<1x256xf32>
    %c32_i32 = arith.constant 32 : i32
    %147 = tpu.dynamic_rotate %146 by %c32_i32 dim 1 : vector<1x256xf32>, i32 -> vector<1x256xf32>
    %c10_69 = arith.constant 10 : index
    %c0_70 = arith.constant 0 : index
    %148 = vector.load %arg5[%c10_69, %c0_70] : memref<49x256xf32, #tpu.memory_space<vmem>>, vector<1x256xf32>
    %149 = arith.mulf %147, %148 : vector<1x256xf32>
    %150 = arith.addf %139, %149 : vector<1x256xf32>
    %c0_71 = arith.constant 0 : index
    %c11 = arith.constant 11 : index
    %151 = memref.load %arg4[%c0_71, %c11] : memref<2x49xf32, #tpu.memory_space<smem>>
    %152 = vector.broadcast %151 : f32 to vector<1x256xf32>
    %153 = arith.mulf %152, %28 : vector<1x256xf32>
    %c1_72 = arith.constant 1 : index
    %c11_73 = arith.constant 11 : index
    %154 = memref.load %arg4[%c1_72, %c11_73] : memref<2x49xf32, #tpu.memory_space<smem>>
    %155 = vector.broadcast %154 : f32 to vector<1x256xf32>
    %156 = arith.mulf %155, %30 : vector<1x256xf32>
    %157 = arith.addf %153, %156 : vector<1x256xf32>
    %c31_i32 = arith.constant 31 : i32
    %158 = tpu.dynamic_rotate %157 by %c31_i32 dim 1 : vector<1x256xf32>, i32 -> vector<1x256xf32>
    %c11_74 = arith.constant 11 : index
    %c0_75 = arith.constant 0 : index
    %159 = vector.load %arg5[%c11_74, %c0_75] : memref<49x256xf32, #tpu.memory_space<vmem>>, vector<1x256xf32>
    %160 = arith.mulf %158, %159 : vector<1x256xf32>
    %161 = arith.addf %150, %160 : vector<1x256xf32>
    %c0_76 = arith.constant 0 : index
    %c12 = arith.constant 12 : index
    %162 = memref.load %arg4[%c0_76, %c12] : memref<2x49xf32, #tpu.memory_space<smem>>
    %163 = vector.broadcast %162 : f32 to vector<1x256xf32>
    %164 = arith.mulf %163, %28 : vector<1x256xf32>
    %c1_77 = arith.constant 1 : index
    %c12_78 = arith.constant 12 : index
    %165 = memref.load %arg4[%c1_77, %c12_78] : memref<2x49xf32, #tpu.memory_space<smem>>
    %166 = vector.broadcast %165 : f32 to vector<1x256xf32>
    %167 = arith.mulf %166, %30 : vector<1x256xf32>
    %168 = arith.addf %164, %167 : vector<1x256xf32>
    %c30_i32 = arith.constant 30 : i32
    %169 = tpu.dynamic_rotate %168 by %c30_i32 dim 1 : vector<1x256xf32>, i32 -> vector<1x256xf32>
    %c12_79 = arith.constant 12 : index
    %c0_80 = arith.constant 0 : index
    %170 = vector.load %arg5[%c12_79, %c0_80] : memref<49x256xf32, #tpu.memory_space<vmem>>, vector<1x256xf32>
    %171 = arith.mulf %169, %170 : vector<1x256xf32>
    %172 = arith.addf %161, %171 : vector<1x256xf32>
    %c0_81 = arith.constant 0 : index
    %c13 = arith.constant 13 : index
    %173 = memref.load %arg4[%c0_81, %c13] : memref<2x49xf32, #tpu.memory_space<smem>>
    %174 = vector.broadcast %173 : f32 to vector<1x256xf32>
    %175 = arith.mulf %174, %28 : vector<1x256xf32>
    %c1_82 = arith.constant 1 : index
    %c13_83 = arith.constant 13 : index
    %176 = memref.load %arg4[%c1_82, %c13_83] : memref<2x49xf32, #tpu.memory_space<smem>>
    %177 = vector.broadcast %176 : f32 to vector<1x256xf32>
    %178 = arith.mulf %177, %30 : vector<1x256xf32>
    %179 = arith.addf %175, %178 : vector<1x256xf32>
    %c29_i32 = arith.constant 29 : i32
    %180 = tpu.dynamic_rotate %179 by %c29_i32 dim 1 : vector<1x256xf32>, i32 -> vector<1x256xf32>
    %c13_84 = arith.constant 13 : index
    %c0_85 = arith.constant 0 : index
    %181 = vector.load %arg5[%c13_84, %c0_85] : memref<49x256xf32, #tpu.memory_space<vmem>>, vector<1x256xf32>
    %182 = arith.mulf %180, %181 : vector<1x256xf32>
    %183 = arith.addf %172, %182 : vector<1x256xf32>
    %c0_86 = arith.constant 0 : index
    %c14 = arith.constant 14 : index
    %184 = memref.load %arg4[%c0_86, %c14] : memref<2x49xf32, #tpu.memory_space<smem>>
    %185 = vector.broadcast %184 : f32 to vector<1x256xf32>
    %186 = arith.mulf %185, %28 : vector<1x256xf32>
    %c1_87 = arith.constant 1 : index
    %c14_88 = arith.constant 14 : index
    %187 = memref.load %arg4[%c1_87, %c14_88] : memref<2x49xf32, #tpu.memory_space<smem>>
    %188 = vector.broadcast %187 : f32 to vector<1x256xf32>
    %189 = arith.mulf %188, %30 : vector<1x256xf32>
    %190 = arith.addf %186, %189 : vector<1x256xf32>
    %c19_i32 = arith.constant 19 : i32
    %191 = tpu.dynamic_rotate %190 by %c19_i32 dim 1 : vector<1x256xf32>, i32 -> vector<1x256xf32>
    %c14_89 = arith.constant 14 : index
    %c0_90 = arith.constant 0 : index
    %192 = vector.load %arg5[%c14_89, %c0_90] : memref<49x256xf32, #tpu.memory_space<vmem>>, vector<1x256xf32>
    %193 = arith.mulf %191, %192 : vector<1x256xf32>
    %194 = arith.addf %183, %193 : vector<1x256xf32>
    %c0_91 = arith.constant 0 : index
    %c15 = arith.constant 15 : index
    %195 = memref.load %arg4[%c0_91, %c15] : memref<2x49xf32, #tpu.memory_space<smem>>
    %196 = vector.broadcast %195 : f32 to vector<1x256xf32>
    %197 = arith.mulf %196, %28 : vector<1x256xf32>
    %c1_92 = arith.constant 1 : index
    %c15_93 = arith.constant 15 : index
    %198 = memref.load %arg4[%c1_92, %c15_93] : memref<2x49xf32, #tpu.memory_space<smem>>
    %199 = vector.broadcast %198 : f32 to vector<1x256xf32>
    %200 = arith.mulf %199, %30 : vector<1x256xf32>
    %201 = arith.addf %197, %200 : vector<1x256xf32>
    %c18_i32 = arith.constant 18 : i32
    %202 = tpu.dynamic_rotate %201 by %c18_i32 dim 1 : vector<1x256xf32>, i32 -> vector<1x256xf32>
    %c15_94 = arith.constant 15 : index
    %c0_95 = arith.constant 0 : index
    %203 = vector.load %arg5[%c15_94, %c0_95] : memref<49x256xf32, #tpu.memory_space<vmem>>, vector<1x256xf32>
    %204 = arith.mulf %202, %203 : vector<1x256xf32>
    %205 = arith.addf %194, %204 : vector<1x256xf32>
    %c0_96 = arith.constant 0 : index
    %c16 = arith.constant 16 : index
    %206 = memref.load %arg4[%c0_96, %c16] : memref<2x49xf32, #tpu.memory_space<smem>>
    %207 = vector.broadcast %206 : f32 to vector<1x256xf32>
    %208 = arith.mulf %207, %28 : vector<1x256xf32>
    %c1_97 = arith.constant 1 : index
    %c16_98 = arith.constant 16 : index
    %209 = memref.load %arg4[%c1_97, %c16_98] : memref<2x49xf32, #tpu.memory_space<smem>>
    %210 = vector.broadcast %209 : f32 to vector<1x256xf32>
    %211 = arith.mulf %210, %30 : vector<1x256xf32>
    %212 = arith.addf %208, %211 : vector<1x256xf32>
    %c17_i32 = arith.constant 17 : i32
    %213 = tpu.dynamic_rotate %212 by %c17_i32 dim 1 : vector<1x256xf32>, i32 -> vector<1x256xf32>
    %c16_99 = arith.constant 16 : index
    %c0_100 = arith.constant 0 : index
    %214 = vector.load %arg5[%c16_99, %c0_100] : memref<49x256xf32, #tpu.memory_space<vmem>>, vector<1x256xf32>
    %215 = arith.mulf %213, %214 : vector<1x256xf32>
    %216 = arith.addf %205, %215 : vector<1x256xf32>
    %c0_101 = arith.constant 0 : index
    %c17 = arith.constant 17 : index
    %217 = memref.load %arg4[%c0_101, %c17] : memref<2x49xf32, #tpu.memory_space<smem>>
    %218 = vector.broadcast %217 : f32 to vector<1x256xf32>
    %219 = arith.mulf %218, %28 : vector<1x256xf32>
    %c1_102 = arith.constant 1 : index
    %c17_103 = arith.constant 17 : index
    %220 = memref.load %arg4[%c1_102, %c17_103] : memref<2x49xf32, #tpu.memory_space<smem>>
    %221 = vector.broadcast %220 : f32 to vector<1x256xf32>
    %222 = arith.mulf %221, %30 : vector<1x256xf32>
    %223 = arith.addf %219, %222 : vector<1x256xf32>
    %c16_i32 = arith.constant 16 : i32
    %224 = tpu.dynamic_rotate %223 by %c16_i32 dim 1 : vector<1x256xf32>, i32 -> vector<1x256xf32>
    %c17_104 = arith.constant 17 : index
    %c0_105 = arith.constant 0 : index
    %225 = vector.load %arg5[%c17_104, %c0_105] : memref<49x256xf32, #tpu.memory_space<vmem>>, vector<1x256xf32>
    %226 = arith.mulf %224, %225 : vector<1x256xf32>
    %227 = arith.addf %216, %226 : vector<1x256xf32>
    %c0_106 = arith.constant 0 : index
    %c18 = arith.constant 18 : index
    %228 = memref.load %arg4[%c0_106, %c18] : memref<2x49xf32, #tpu.memory_space<smem>>
    %229 = vector.broadcast %228 : f32 to vector<1x256xf32>
    %230 = arith.mulf %229, %28 : vector<1x256xf32>
    %c1_107 = arith.constant 1 : index
    %c18_108 = arith.constant 18 : index
    %231 = memref.load %arg4[%c1_107, %c18_108] : memref<2x49xf32, #tpu.memory_space<smem>>
    %232 = vector.broadcast %231 : f32 to vector<1x256xf32>
    %233 = arith.mulf %232, %30 : vector<1x256xf32>
    %234 = arith.addf %230, %233 : vector<1x256xf32>
    %c15_i32 = arith.constant 15 : i32
    %235 = tpu.dynamic_rotate %234 by %c15_i32 dim 1 : vector<1x256xf32>, i32 -> vector<1x256xf32>
    %c18_109 = arith.constant 18 : index
    %c0_110 = arith.constant 0 : index
    %236 = vector.load %arg5[%c18_109, %c0_110] : memref<49x256xf32, #tpu.memory_space<vmem>>, vector<1x256xf32>
    %237 = arith.mulf %235, %236 : vector<1x256xf32>
    %238 = arith.addf %227, %237 : vector<1x256xf32>
    %c0_111 = arith.constant 0 : index
    %c19 = arith.constant 19 : index
    %239 = memref.load %arg4[%c0_111, %c19] : memref<2x49xf32, #tpu.memory_space<smem>>
    %240 = vector.broadcast %239 : f32 to vector<1x256xf32>
    %241 = arith.mulf %240, %28 : vector<1x256xf32>
    %c1_112 = arith.constant 1 : index
    %c19_113 = arith.constant 19 : index
    %242 = memref.load %arg4[%c1_112, %c19_113] : memref<2x49xf32, #tpu.memory_space<smem>>
    %243 = vector.broadcast %242 : f32 to vector<1x256xf32>
    %244 = arith.mulf %243, %30 : vector<1x256xf32>
    %245 = arith.addf %241, %244 : vector<1x256xf32>
    %c14_i32 = arith.constant 14 : i32
    %246 = tpu.dynamic_rotate %245 by %c14_i32 dim 1 : vector<1x256xf32>, i32 -> vector<1x256xf32>
    %c19_114 = arith.constant 19 : index
    %c0_115 = arith.constant 0 : index
    %247 = vector.load %arg5[%c19_114, %c0_115] : memref<49x256xf32, #tpu.memory_space<vmem>>, vector<1x256xf32>
    %248 = arith.mulf %246, %247 : vector<1x256xf32>
    %249 = arith.addf %238, %248 : vector<1x256xf32>
    %c0_116 = arith.constant 0 : index
    %c20 = arith.constant 20 : index
    %250 = memref.load %arg4[%c0_116, %c20] : memref<2x49xf32, #tpu.memory_space<smem>>
    %251 = vector.broadcast %250 : f32 to vector<1x256xf32>
    %252 = arith.mulf %251, %28 : vector<1x256xf32>
    %c1_117 = arith.constant 1 : index
    %c20_118 = arith.constant 20 : index
    %253 = memref.load %arg4[%c1_117, %c20_118] : memref<2x49xf32, #tpu.memory_space<smem>>
    %254 = vector.broadcast %253 : f32 to vector<1x256xf32>
    %255 = arith.mulf %254, %30 : vector<1x256xf32>
    %256 = arith.addf %252, %255 : vector<1x256xf32>
    %c13_i32 = arith.constant 13 : i32
    %257 = tpu.dynamic_rotate %256 by %c13_i32 dim 1 : vector<1x256xf32>, i32 -> vector<1x256xf32>
    %c20_119 = arith.constant 20 : index
    %c0_120 = arith.constant 0 : index
    %258 = vector.load %arg5[%c20_119, %c0_120] : memref<49x256xf32, #tpu.memory_space<vmem>>, vector<1x256xf32>
    %259 = arith.mulf %257, %258 : vector<1x256xf32>
    %260 = arith.addf %249, %259 : vector<1x256xf32>
    %c0_121 = arith.constant 0 : index
    %c21 = arith.constant 21 : index
    %261 = memref.load %arg4[%c0_121, %c21] : memref<2x49xf32, #tpu.memory_space<smem>>
    %262 = vector.broadcast %261 : f32 to vector<1x256xf32>
    %263 = arith.mulf %262, %28 : vector<1x256xf32>
    %c1_122 = arith.constant 1 : index
    %c21_123 = arith.constant 21 : index
    %264 = memref.load %arg4[%c1_122, %c21_123] : memref<2x49xf32, #tpu.memory_space<smem>>
    %265 = vector.broadcast %264 : f32 to vector<1x256xf32>
    %266 = arith.mulf %265, %30 : vector<1x256xf32>
    %267 = arith.addf %263, %266 : vector<1x256xf32>
    %c3_i32 = arith.constant 3 : i32
    %268 = tpu.dynamic_rotate %267 by %c3_i32 dim 1 : vector<1x256xf32>, i32 -> vector<1x256xf32>
    %c21_124 = arith.constant 21 : index
    %c0_125 = arith.constant 0 : index
    %269 = vector.load %arg5[%c21_124, %c0_125] : memref<49x256xf32, #tpu.memory_space<vmem>>, vector<1x256xf32>
    %270 = arith.mulf %268, %269 : vector<1x256xf32>
    %271 = arith.addf %260, %270 : vector<1x256xf32>
    %c0_126 = arith.constant 0 : index
    %c22 = arith.constant 22 : index
    %272 = memref.load %arg4[%c0_126, %c22] : memref<2x49xf32, #tpu.memory_space<smem>>
    %273 = vector.broadcast %272 : f32 to vector<1x256xf32>
    %274 = arith.mulf %273, %28 : vector<1x256xf32>
    %c1_127 = arith.constant 1 : index
    %c22_128 = arith.constant 22 : index
    %275 = memref.load %arg4[%c1_127, %c22_128] : memref<2x49xf32, #tpu.memory_space<smem>>
    %276 = vector.broadcast %275 : f32 to vector<1x256xf32>
    %277 = arith.mulf %276, %30 : vector<1x256xf32>
    %278 = arith.addf %274, %277 : vector<1x256xf32>
    %c2_i32 = arith.constant 2 : i32
    %279 = tpu.dynamic_rotate %278 by %c2_i32 dim 1 : vector<1x256xf32>, i32 -> vector<1x256xf32>
    %c22_129 = arith.constant 22 : index
    %c0_130 = arith.constant 0 : index
    %280 = vector.load %arg5[%c22_129, %c0_130] : memref<49x256xf32, #tpu.memory_space<vmem>>, vector<1x256xf32>
    %281 = arith.mulf %279, %280 : vector<1x256xf32>
    %282 = arith.addf %271, %281 : vector<1x256xf32>
    %c0_131 = arith.constant 0 : index
    %c23 = arith.constant 23 : index
    %283 = memref.load %arg4[%c0_131, %c23] : memref<2x49xf32, #tpu.memory_space<smem>>
    %284 = vector.broadcast %283 : f32 to vector<1x256xf32>
    %285 = arith.mulf %284, %28 : vector<1x256xf32>
    %c1_132 = arith.constant 1 : index
    %c23_133 = arith.constant 23 : index
    %286 = memref.load %arg4[%c1_132, %c23_133] : memref<2x49xf32, #tpu.memory_space<smem>>
    %287 = vector.broadcast %286 : f32 to vector<1x256xf32>
    %288 = arith.mulf %287, %30 : vector<1x256xf32>
    %289 = arith.addf %285, %288 : vector<1x256xf32>
    %c1_i32 = arith.constant 1 : i32
    %290 = tpu.dynamic_rotate %289 by %c1_i32 dim 1 : vector<1x256xf32>, i32 -> vector<1x256xf32>
    %c23_134 = arith.constant 23 : index
    %c0_135 = arith.constant 0 : index
    %291 = vector.load %arg5[%c23_134, %c0_135] : memref<49x256xf32, #tpu.memory_space<vmem>>, vector<1x256xf32>
    %292 = arith.mulf %290, %291 : vector<1x256xf32>
    %293 = arith.addf %282, %292 : vector<1x256xf32>
    %c0_136 = arith.constant 0 : index
    %c24 = arith.constant 24 : index
    %294 = memref.load %arg4[%c0_136, %c24] : memref<2x49xf32, #tpu.memory_space<smem>>
    %295 = vector.broadcast %294 : f32 to vector<1x256xf32>
    %296 = arith.mulf %295, %28 : vector<1x256xf32>
    %c1_137 = arith.constant 1 : index
    %c24_138 = arith.constant 24 : index
    %297 = memref.load %arg4[%c1_137, %c24_138] : memref<2x49xf32, #tpu.memory_space<smem>>
    %298 = vector.broadcast %297 : f32 to vector<1x256xf32>
    %299 = arith.mulf %298, %30 : vector<1x256xf32>
    %300 = arith.addf %296, %299 : vector<1x256xf32>
    %c24_139 = arith.constant 24 : index
    %c0_140 = arith.constant 0 : index
    %301 = vector.load %arg5[%c24_139, %c0_140] : memref<49x256xf32, #tpu.memory_space<vmem>>, vector<1x256xf32>
    %302 = arith.mulf %300, %301 : vector<1x256xf32>
    %303 = arith.addf %293, %302 : vector<1x256xf32>
    %c0_141 = arith.constant 0 : index
    %c25 = arith.constant 25 : index
    %304 = memref.load %arg4[%c0_141, %c25] : memref<2x49xf32, #tpu.memory_space<smem>>
    %305 = vector.broadcast %304 : f32 to vector<1x256xf32>
    %306 = arith.mulf %305, %28 : vector<1x256xf32>
    %c1_142 = arith.constant 1 : index
    %c25_143 = arith.constant 25 : index
    %307 = memref.load %arg4[%c1_142, %c25_143] : memref<2x49xf32, #tpu.memory_space<smem>>
    %308 = vector.broadcast %307 : f32 to vector<1x256xf32>
    %309 = arith.mulf %308, %30 : vector<1x256xf32>
    %310 = arith.addf %306, %309 : vector<1x256xf32>
    %c255_i32 = arith.constant 255 : i32
    %311 = tpu.dynamic_rotate %310 by %c255_i32 dim 1 : vector<1x256xf32>, i32 -> vector<1x256xf32>
    %c25_144 = arith.constant 25 : index
    %c0_145 = arith.constant 0 : index
    %312 = vector.load %arg5[%c25_144, %c0_145] : memref<49x256xf32, #tpu.memory_space<vmem>>, vector<1x256xf32>
    %313 = arith.mulf %311, %312 : vector<1x256xf32>
    %314 = arith.addf %303, %313 : vector<1x256xf32>
    %c0_146 = arith.constant 0 : index
    %c26 = arith.constant 26 : index
    %315 = memref.load %arg4[%c0_146, %c26] : memref<2x49xf32, #tpu.memory_space<smem>>
    %316 = vector.broadcast %315 : f32 to vector<1x256xf32>
    %317 = arith.mulf %316, %28 : vector<1x256xf32>
    %c1_147 = arith.constant 1 : index
    %c26_148 = arith.constant 26 : index
    %318 = memref.load %arg4[%c1_147, %c26_148] : memref<2x49xf32, #tpu.memory_space<smem>>
    %319 = vector.broadcast %318 : f32 to vector<1x256xf32>
    %320 = arith.mulf %319, %30 : vector<1x256xf32>
    %321 = arith.addf %317, %320 : vector<1x256xf32>
    %c254_i32 = arith.constant 254 : i32
    %322 = tpu.dynamic_rotate %321 by %c254_i32 dim 1 : vector<1x256xf32>, i32 -> vector<1x256xf32>
    %c26_149 = arith.constant 26 : index
    %c0_150 = arith.constant 0 : index
    %323 = vector.load %arg5[%c26_149, %c0_150] : memref<49x256xf32, #tpu.memory_space<vmem>>, vector<1x256xf32>
    %324 = arith.mulf %322, %323 : vector<1x256xf32>
    %325 = arith.addf %314, %324 : vector<1x256xf32>
    %c0_151 = arith.constant 0 : index
    %c27 = arith.constant 27 : index
    %326 = memref.load %arg4[%c0_151, %c27] : memref<2x49xf32, #tpu.memory_space<smem>>
    %327 = vector.broadcast %326 : f32 to vector<1x256xf32>
    %328 = arith.mulf %327, %28 : vector<1x256xf32>
    %c1_152 = arith.constant 1 : index
    %c27_153 = arith.constant 27 : index
    %329 = memref.load %arg4[%c1_152, %c27_153] : memref<2x49xf32, #tpu.memory_space<smem>>
    %330 = vector.broadcast %329 : f32 to vector<1x256xf32>
    %331 = arith.mulf %330, %30 : vector<1x256xf32>
    %332 = arith.addf %328, %331 : vector<1x256xf32>
    %c253_i32 = arith.constant 253 : i32
    %333 = tpu.dynamic_rotate %332 by %c253_i32 dim 1 : vector<1x256xf32>, i32 -> vector<1x256xf32>
    %c27_154 = arith.constant 27 : index
    %c0_155 = arith.constant 0 : index
    %334 = vector.load %arg5[%c27_154, %c0_155] : memref<49x256xf32, #tpu.memory_space<vmem>>, vector<1x256xf32>
    %335 = arith.mulf %333, %334 : vector<1x256xf32>
    %336 = arith.addf %325, %335 : vector<1x256xf32>
    %c0_156 = arith.constant 0 : index
    %c28 = arith.constant 28 : index
    %337 = memref.load %arg4[%c0_156, %c28] : memref<2x49xf32, #tpu.memory_space<smem>>
    %338 = vector.broadcast %337 : f32 to vector<1x256xf32>
    %339 = arith.mulf %338, %28 : vector<1x256xf32>
    %c1_157 = arith.constant 1 : index
    %c28_158 = arith.constant 28 : index
    %340 = memref.load %arg4[%c1_157, %c28_158] : memref<2x49xf32, #tpu.memory_space<smem>>
    %341 = vector.broadcast %340 : f32 to vector<1x256xf32>
    %342 = arith.mulf %341, %30 : vector<1x256xf32>
    %343 = arith.addf %339, %342 : vector<1x256xf32>
    %c243_i32 = arith.constant 243 : i32
    %344 = tpu.dynamic_rotate %343 by %c243_i32 dim 1 : vector<1x256xf32>, i32 -> vector<1x256xf32>
    %c28_159 = arith.constant 28 : index
    %c0_160 = arith.constant 0 : index
    %345 = vector.load %arg5[%c28_159, %c0_160] : memref<49x256xf32, #tpu.memory_space<vmem>>, vector<1x256xf32>
    %346 = arith.mulf %344, %345 : vector<1x256xf32>
    %347 = arith.addf %336, %346 : vector<1x256xf32>
    %c0_161 = arith.constant 0 : index
    %c29 = arith.constant 29 : index
    %348 = memref.load %arg4[%c0_161, %c29] : memref<2x49xf32, #tpu.memory_space<smem>>
    %349 = vector.broadcast %348 : f32 to vector<1x256xf32>
    %350 = arith.mulf %349, %28 : vector<1x256xf32>
    %c1_162 = arith.constant 1 : index
    %c29_163 = arith.constant 29 : index
    %351 = memref.load %arg4[%c1_162, %c29_163] : memref<2x49xf32, #tpu.memory_space<smem>>
    %352 = vector.broadcast %351 : f32 to vector<1x256xf32>
    %353 = arith.mulf %352, %30 : vector<1x256xf32>
    %354 = arith.addf %350, %353 : vector<1x256xf32>
    %c242_i32 = arith.constant 242 : i32
    %355 = tpu.dynamic_rotate %354 by %c242_i32 dim 1 : vector<1x256xf32>, i32 -> vector<1x256xf32>
    %c29_164 = arith.constant 29 : index
    %c0_165 = arith.constant 0 : index
    %356 = vector.load %arg5[%c29_164, %c0_165] : memref<49x256xf32, #tpu.memory_space<vmem>>, vector<1x256xf32>
    %357 = arith.mulf %355, %356 : vector<1x256xf32>
    %358 = arith.addf %347, %357 : vector<1x256xf32>
    %c0_166 = arith.constant 0 : index
    %c30 = arith.constant 30 : index
    %359 = memref.load %arg4[%c0_166, %c30] : memref<2x49xf32, #tpu.memory_space<smem>>
    %360 = vector.broadcast %359 : f32 to vector<1x256xf32>
    %361 = arith.mulf %360, %28 : vector<1x256xf32>
    %c1_167 = arith.constant 1 : index
    %c30_168 = arith.constant 30 : index
    %362 = memref.load %arg4[%c1_167, %c30_168] : memref<2x49xf32, #tpu.memory_space<smem>>
    %363 = vector.broadcast %362 : f32 to vector<1x256xf32>
    %364 = arith.mulf %363, %30 : vector<1x256xf32>
    %365 = arith.addf %361, %364 : vector<1x256xf32>
    %c241_i32 = arith.constant 241 : i32
    %366 = tpu.dynamic_rotate %365 by %c241_i32 dim 1 : vector<1x256xf32>, i32 -> vector<1x256xf32>
    %c30_169 = arith.constant 30 : index
    %c0_170 = arith.constant 0 : index
    %367 = vector.load %arg5[%c30_169, %c0_170] : memref<49x256xf32, #tpu.memory_space<vmem>>, vector<1x256xf32>
    %368 = arith.mulf %366, %367 : vector<1x256xf32>
    %369 = arith.addf %358, %368 : vector<1x256xf32>
    %c0_171 = arith.constant 0 : index
    %c31 = arith.constant 31 : index
    %370 = memref.load %arg4[%c0_171, %c31] : memref<2x49xf32, #tpu.memory_space<smem>>
    %371 = vector.broadcast %370 : f32 to vector<1x256xf32>
    %372 = arith.mulf %371, %28 : vector<1x256xf32>
    %c1_172 = arith.constant 1 : index
    %c31_173 = arith.constant 31 : index
    %373 = memref.load %arg4[%c1_172, %c31_173] : memref<2x49xf32, #tpu.memory_space<smem>>
    %374 = vector.broadcast %373 : f32 to vector<1x256xf32>
    %375 = arith.mulf %374, %30 : vector<1x256xf32>
    %376 = arith.addf %372, %375 : vector<1x256xf32>
    %c240_i32 = arith.constant 240 : i32
    %377 = tpu.dynamic_rotate %376 by %c240_i32 dim 1 : vector<1x256xf32>, i32 -> vector<1x256xf32>
    %c31_174 = arith.constant 31 : index
    %c0_175 = arith.constant 0 : index
    %378 = vector.load %arg5[%c31_174, %c0_175] : memref<49x256xf32, #tpu.memory_space<vmem>>, vector<1x256xf32>
    %379 = arith.mulf %377, %378 : vector<1x256xf32>
    %380 = arith.addf %369, %379 : vector<1x256xf32>
    %c0_176 = arith.constant 0 : index
    %c32 = arith.constant 32 : index
    %381 = memref.load %arg4[%c0_176, %c32] : memref<2x49xf32, #tpu.memory_space<smem>>
    %382 = vector.broadcast %381 : f32 to vector<1x256xf32>
    %383 = arith.mulf %382, %28 : vector<1x256xf32>
    %c1_177 = arith.constant 1 : index
    %c32_178 = arith.constant 32 : index
    %384 = memref.load %arg4[%c1_177, %c32_178] : memref<2x49xf32, #tpu.memory_space<smem>>
    %385 = vector.broadcast %384 : f32 to vector<1x256xf32>
    %386 = arith.mulf %385, %30 : vector<1x256xf32>
    %387 = arith.addf %383, %386 : vector<1x256xf32>
    %c239_i32 = arith.constant 239 : i32
    %388 = tpu.dynamic_rotate %387 by %c239_i32 dim 1 : vector<1x256xf32>, i32 -> vector<1x256xf32>
    %c32_179 = arith.constant 32 : index
    %c0_180 = arith.constant 0 : index
    %389 = vector.load %arg5[%c32_179, %c0_180] : memref<49x256xf32, #tpu.memory_space<vmem>>, vector<1x256xf32>
    %390 = arith.mulf %388, %389 : vector<1x256xf32>
    %391 = arith.addf %380, %390 : vector<1x256xf32>
    %c0_181 = arith.constant 0 : index
    %c33 = arith.constant 33 : index
    %392 = memref.load %arg4[%c0_181, %c33] : memref<2x49xf32, #tpu.memory_space<smem>>
    %393 = vector.broadcast %392 : f32 to vector<1x256xf32>
    %394 = arith.mulf %393, %28 : vector<1x256xf32>
    %c1_182 = arith.constant 1 : index
    %c33_183 = arith.constant 33 : index
    %395 = memref.load %arg4[%c1_182, %c33_183] : memref<2x49xf32, #tpu.memory_space<smem>>
    %396 = vector.broadcast %395 : f32 to vector<1x256xf32>
    %397 = arith.mulf %396, %30 : vector<1x256xf32>
    %398 = arith.addf %394, %397 : vector<1x256xf32>
    %c238_i32 = arith.constant 238 : i32
    %399 = tpu.dynamic_rotate %398 by %c238_i32 dim 1 : vector<1x256xf32>, i32 -> vector<1x256xf32>
    %c33_184 = arith.constant 33 : index
    %c0_185 = arith.constant 0 : index
    %400 = vector.load %arg5[%c33_184, %c0_185] : memref<49x256xf32, #tpu.memory_space<vmem>>, vector<1x256xf32>
    %401 = arith.mulf %399, %400 : vector<1x256xf32>
    %402 = arith.addf %391, %401 : vector<1x256xf32>
    %c0_186 = arith.constant 0 : index
    %c34 = arith.constant 34 : index
    %403 = memref.load %arg4[%c0_186, %c34] : memref<2x49xf32, #tpu.memory_space<smem>>
    %404 = vector.broadcast %403 : f32 to vector<1x256xf32>
    %405 = arith.mulf %404, %28 : vector<1x256xf32>
    %c1_187 = arith.constant 1 : index
    %c34_188 = arith.constant 34 : index
    %406 = memref.load %arg4[%c1_187, %c34_188] : memref<2x49xf32, #tpu.memory_space<smem>>
    %407 = vector.broadcast %406 : f32 to vector<1x256xf32>
    %408 = arith.mulf %407, %30 : vector<1x256xf32>
    %409 = arith.addf %405, %408 : vector<1x256xf32>
    %c237_i32 = arith.constant 237 : i32
    %410 = tpu.dynamic_rotate %409 by %c237_i32 dim 1 : vector<1x256xf32>, i32 -> vector<1x256xf32>
    %c34_189 = arith.constant 34 : index
    %c0_190 = arith.constant 0 : index
    %411 = vector.load %arg5[%c34_189, %c0_190] : memref<49x256xf32, #tpu.memory_space<vmem>>, vector<1x256xf32>
    %412 = arith.mulf %410, %411 : vector<1x256xf32>
    %413 = arith.addf %402, %412 : vector<1x256xf32>
    %c0_191 = arith.constant 0 : index
    %c35 = arith.constant 35 : index
    %414 = memref.load %arg4[%c0_191, %c35] : memref<2x49xf32, #tpu.memory_space<smem>>
    %415 = vector.broadcast %414 : f32 to vector<1x256xf32>
    %416 = arith.mulf %415, %28 : vector<1x256xf32>
    %c1_192 = arith.constant 1 : index
    %c35_193 = arith.constant 35 : index
    %417 = memref.load %arg4[%c1_192, %c35_193] : memref<2x49xf32, #tpu.memory_space<smem>>
    %418 = vector.broadcast %417 : f32 to vector<1x256xf32>
    %419 = arith.mulf %418, %30 : vector<1x256xf32>
    %420 = arith.addf %416, %419 : vector<1x256xf32>
    %c227_i32 = arith.constant 227 : i32
    %421 = tpu.dynamic_rotate %420 by %c227_i32 dim 1 : vector<1x256xf32>, i32 -> vector<1x256xf32>
    %c35_194 = arith.constant 35 : index
    %c0_195 = arith.constant 0 : index
    %422 = vector.load %arg5[%c35_194, %c0_195] : memref<49x256xf32, #tpu.memory_space<vmem>>, vector<1x256xf32>
    %423 = arith.mulf %421, %422 : vector<1x256xf32>
    %424 = arith.addf %413, %423 : vector<1x256xf32>
    %c0_196 = arith.constant 0 : index
    %c36 = arith.constant 36 : index
    %425 = memref.load %arg4[%c0_196, %c36] : memref<2x49xf32, #tpu.memory_space<smem>>
    %426 = vector.broadcast %425 : f32 to vector<1x256xf32>
    %427 = arith.mulf %426, %28 : vector<1x256xf32>
    %c1_197 = arith.constant 1 : index
    %c36_198 = arith.constant 36 : index
    %428 = memref.load %arg4[%c1_197, %c36_198] : memref<2x49xf32, #tpu.memory_space<smem>>
    %429 = vector.broadcast %428 : f32 to vector<1x256xf32>
    %430 = arith.mulf %429, %30 : vector<1x256xf32>
    %431 = arith.addf %427, %430 : vector<1x256xf32>
    %c226_i32 = arith.constant 226 : i32
    %432 = tpu.dynamic_rotate %431 by %c226_i32 dim 1 : vector<1x256xf32>, i32 -> vector<1x256xf32>
    %c36_199 = arith.constant 36 : index
    %c0_200 = arith.constant 0 : index
    %433 = vector.load %arg5[%c36_199, %c0_200] : memref<49x256xf32, #tpu.memory_space<vmem>>, vector<1x256xf32>
    %434 = arith.mulf %432, %433 : vector<1x256xf32>
    %435 = arith.addf %424, %434 : vector<1x256xf32>
    %c0_201 = arith.constant 0 : index
    %c37 = arith.constant 37 : index
    %436 = memref.load %arg4[%c0_201, %c37] : memref<2x49xf32, #tpu.memory_space<smem>>
    %437 = vector.broadcast %436 : f32 to vector<1x256xf32>
    %438 = arith.mulf %437, %28 : vector<1x256xf32>
    %c1_202 = arith.constant 1 : index
    %c37_203 = arith.constant 37 : index
    %439 = memref.load %arg4[%c1_202, %c37_203] : memref<2x49xf32, #tpu.memory_space<smem>>
    %440 = vector.broadcast %439 : f32 to vector<1x256xf32>
    %441 = arith.mulf %440, %30 : vector<1x256xf32>
    %442 = arith.addf %438, %441 : vector<1x256xf32>
    %c225_i32 = arith.constant 225 : i32
    %443 = tpu.dynamic_rotate %442 by %c225_i32 dim 1 : vector<1x256xf32>, i32 -> vector<1x256xf32>
    %c37_204 = arith.constant 37 : index
    %c0_205 = arith.constant 0 : index
    %444 = vector.load %arg5[%c37_204, %c0_205] : memref<49x256xf32, #tpu.memory_space<vmem>>, vector<1x256xf32>
    %445 = arith.mulf %443, %444 : vector<1x256xf32>
    %446 = arith.addf %435, %445 : vector<1x256xf32>
    %c0_206 = arith.constant 0 : index
    %c38 = arith.constant 38 : index
    %447 = memref.load %arg4[%c0_206, %c38] : memref<2x49xf32, #tpu.memory_space<smem>>
    %448 = vector.broadcast %447 : f32 to vector<1x256xf32>
    %449 = arith.mulf %448, %28 : vector<1x256xf32>
    %c1_207 = arith.constant 1 : index
    %c38_208 = arith.constant 38 : index
    %450 = memref.load %arg4[%c1_207, %c38_208] : memref<2x49xf32, #tpu.memory_space<smem>>
    %451 = vector.broadcast %450 : f32 to vector<1x256xf32>
    %452 = arith.mulf %451, %30 : vector<1x256xf32>
    %453 = arith.addf %449, %452 : vector<1x256xf32>
    %c224_i32 = arith.constant 224 : i32
    %454 = tpu.dynamic_rotate %453 by %c224_i32 dim 1 : vector<1x256xf32>, i32 -> vector<1x256xf32>
    %c38_209 = arith.constant 38 : index
    %c0_210 = arith.constant 0 : index
    %455 = vector.load %arg5[%c38_209, %c0_210] : memref<49x256xf32, #tpu.memory_space<vmem>>, vector<1x256xf32>
    %456 = arith.mulf %454, %455 : vector<1x256xf32>
    %457 = arith.addf %446, %456 : vector<1x256xf32>
    %c0_211 = arith.constant 0 : index
    %c39 = arith.constant 39 : index
    %458 = memref.load %arg4[%c0_211, %c39] : memref<2x49xf32, #tpu.memory_space<smem>>
    %459 = vector.broadcast %458 : f32 to vector<1x256xf32>
    %460 = arith.mulf %459, %28 : vector<1x256xf32>
    %c1_212 = arith.constant 1 : index
    %c39_213 = arith.constant 39 : index
    %461 = memref.load %arg4[%c1_212, %c39_213] : memref<2x49xf32, #tpu.memory_space<smem>>
    %462 = vector.broadcast %461 : f32 to vector<1x256xf32>
    %463 = arith.mulf %462, %30 : vector<1x256xf32>
    %464 = arith.addf %460, %463 : vector<1x256xf32>
    %c223_i32 = arith.constant 223 : i32
    %465 = tpu.dynamic_rotate %464 by %c223_i32 dim 1 : vector<1x256xf32>, i32 -> vector<1x256xf32>
    %c39_214 = arith.constant 39 : index
    %c0_215 = arith.constant 0 : index
    %466 = vector.load %arg5[%c39_214, %c0_215] : memref<49x256xf32, #tpu.memory_space<vmem>>, vector<1x256xf32>
    %467 = arith.mulf %465, %466 : vector<1x256xf32>
    %468 = arith.addf %457, %467 : vector<1x256xf32>
    %c0_216 = arith.constant 0 : index
    %c40 = arith.constant 40 : index
    %469 = memref.load %arg4[%c0_216, %c40] : memref<2x49xf32, #tpu.memory_space<smem>>
    %470 = vector.broadcast %469 : f32 to vector<1x256xf32>
    %471 = arith.mulf %470, %28 : vector<1x256xf32>
    %c1_217 = arith.constant 1 : index
    %c40_218 = arith.constant 40 : index
    %472 = memref.load %arg4[%c1_217, %c40_218] : memref<2x49xf32, #tpu.memory_space<smem>>
    %473 = vector.broadcast %472 : f32 to vector<1x256xf32>
    %474 = arith.mulf %473, %30 : vector<1x256xf32>
    %475 = arith.addf %471, %474 : vector<1x256xf32>
    %c222_i32 = arith.constant 222 : i32
    %476 = tpu.dynamic_rotate %475 by %c222_i32 dim 1 : vector<1x256xf32>, i32 -> vector<1x256xf32>
    %c40_219 = arith.constant 40 : index
    %c0_220 = arith.constant 0 : index
    %477 = vector.load %arg5[%c40_219, %c0_220] : memref<49x256xf32, #tpu.memory_space<vmem>>, vector<1x256xf32>
    %478 = arith.mulf %476, %477 : vector<1x256xf32>
    %479 = arith.addf %468, %478 : vector<1x256xf32>
    %c0_221 = arith.constant 0 : index
    %c41 = arith.constant 41 : index
    %480 = memref.load %arg4[%c0_221, %c41] : memref<2x49xf32, #tpu.memory_space<smem>>
    %481 = vector.broadcast %480 : f32 to vector<1x256xf32>
    %482 = arith.mulf %481, %28 : vector<1x256xf32>
    %c1_222 = arith.constant 1 : index
    %c41_223 = arith.constant 41 : index
    %483 = memref.load %arg4[%c1_222, %c41_223] : memref<2x49xf32, #tpu.memory_space<smem>>
    %484 = vector.broadcast %483 : f32 to vector<1x256xf32>
    %485 = arith.mulf %484, %30 : vector<1x256xf32>
    %486 = arith.addf %482, %485 : vector<1x256xf32>
    %c221_i32 = arith.constant 221 : i32
    %487 = tpu.dynamic_rotate %486 by %c221_i32 dim 1 : vector<1x256xf32>, i32 -> vector<1x256xf32>
    %c41_224 = arith.constant 41 : index
    %c0_225 = arith.constant 0 : index
    %488 = vector.load %arg5[%c41_224, %c0_225] : memref<49x256xf32, #tpu.memory_space<vmem>>, vector<1x256xf32>
    %489 = arith.mulf %487, %488 : vector<1x256xf32>
    %490 = arith.addf %479, %489 : vector<1x256xf32>
    %c0_226 = arith.constant 0 : index
    %c42 = arith.constant 42 : index
    %491 = memref.load %arg4[%c0_226, %c42] : memref<2x49xf32, #tpu.memory_space<smem>>
    %492 = vector.broadcast %491 : f32 to vector<1x256xf32>
    %493 = arith.mulf %492, %28 : vector<1x256xf32>
    %c1_227 = arith.constant 1 : index
    %c42_228 = arith.constant 42 : index
    %494 = memref.load %arg4[%c1_227, %c42_228] : memref<2x49xf32, #tpu.memory_space<smem>>
    %495 = vector.broadcast %494 : f32 to vector<1x256xf32>
    %496 = arith.mulf %495, %30 : vector<1x256xf32>
    %497 = arith.addf %493, %496 : vector<1x256xf32>
    %c211_i32 = arith.constant 211 : i32
    %498 = tpu.dynamic_rotate %497 by %c211_i32 dim 1 : vector<1x256xf32>, i32 -> vector<1x256xf32>
    %c42_229 = arith.constant 42 : index
    %c0_230 = arith.constant 0 : index
    %499 = vector.load %arg5[%c42_229, %c0_230] : memref<49x256xf32, #tpu.memory_space<vmem>>, vector<1x256xf32>
    %500 = arith.mulf %498, %499 : vector<1x256xf32>
    %501 = arith.addf %490, %500 : vector<1x256xf32>
    %c0_231 = arith.constant 0 : index
    %c43 = arith.constant 43 : index
    %502 = memref.load %arg4[%c0_231, %c43] : memref<2x49xf32, #tpu.memory_space<smem>>
    %503 = vector.broadcast %502 : f32 to vector<1x256xf32>
    %504 = arith.mulf %503, %28 : vector<1x256xf32>
    %c1_232 = arith.constant 1 : index
    %c43_233 = arith.constant 43 : index
    %505 = memref.load %arg4[%c1_232, %c43_233] : memref<2x49xf32, #tpu.memory_space<smem>>
    %506 = vector.broadcast %505 : f32 to vector<1x256xf32>
    %507 = arith.mulf %506, %30 : vector<1x256xf32>
    %508 = arith.addf %504, %507 : vector<1x256xf32>
    %c210_i32 = arith.constant 210 : i32
    %509 = tpu.dynamic_rotate %508 by %c210_i32 dim 1 : vector<1x256xf32>, i32 -> vector<1x256xf32>
    %c43_234 = arith.constant 43 : index
    %c0_235 = arith.constant 0 : index
    %510 = vector.load %arg5[%c43_234, %c0_235] : memref<49x256xf32, #tpu.memory_space<vmem>>, vector<1x256xf32>
    %511 = arith.mulf %509, %510 : vector<1x256xf32>
    %512 = arith.addf %501, %511 : vector<1x256xf32>
    %c0_236 = arith.constant 0 : index
    %c44 = arith.constant 44 : index
    %513 = memref.load %arg4[%c0_236, %c44] : memref<2x49xf32, #tpu.memory_space<smem>>
    %514 = vector.broadcast %513 : f32 to vector<1x256xf32>
    %515 = arith.mulf %514, %28 : vector<1x256xf32>
    %c1_237 = arith.constant 1 : index
    %c44_238 = arith.constant 44 : index
    %516 = memref.load %arg4[%c1_237, %c44_238] : memref<2x49xf32, #tpu.memory_space<smem>>
    %517 = vector.broadcast %516 : f32 to vector<1x256xf32>
    %518 = arith.mulf %517, %30 : vector<1x256xf32>
    %519 = arith.addf %515, %518 : vector<1x256xf32>
    %c209_i32 = arith.constant 209 : i32
    %520 = tpu.dynamic_rotate %519 by %c209_i32 dim 1 : vector<1x256xf32>, i32 -> vector<1x256xf32>
    %c44_239 = arith.constant 44 : index
    %c0_240 = arith.constant 0 : index
    %521 = vector.load %arg5[%c44_239, %c0_240] : memref<49x256xf32, #tpu.memory_space<vmem>>, vector<1x256xf32>
    %522 = arith.mulf %520, %521 : vector<1x256xf32>
    %523 = arith.addf %512, %522 : vector<1x256xf32>
    %c0_241 = arith.constant 0 : index
    %c45 = arith.constant 45 : index
    %524 = memref.load %arg4[%c0_241, %c45] : memref<2x49xf32, #tpu.memory_space<smem>>
    %525 = vector.broadcast %524 : f32 to vector<1x256xf32>
    %526 = arith.mulf %525, %28 : vector<1x256xf32>
    %c1_242 = arith.constant 1 : index
    %c45_243 = arith.constant 45 : index
    %527 = memref.load %arg4[%c1_242, %c45_243] : memref<2x49xf32, #tpu.memory_space<smem>>
    %528 = vector.broadcast %527 : f32 to vector<1x256xf32>
    %529 = arith.mulf %528, %30 : vector<1x256xf32>
    %530 = arith.addf %526, %529 : vector<1x256xf32>
    %c208_i32 = arith.constant 208 : i32
    %531 = tpu.dynamic_rotate %530 by %c208_i32 dim 1 : vector<1x256xf32>, i32 -> vector<1x256xf32>
    %c45_244 = arith.constant 45 : index
    %c0_245 = arith.constant 0 : index
    %532 = vector.load %arg5[%c45_244, %c0_245] : memref<49x256xf32, #tpu.memory_space<vmem>>, vector<1x256xf32>
    %533 = arith.mulf %531, %532 : vector<1x256xf32>
    %534 = arith.addf %523, %533 : vector<1x256xf32>
    %c0_246 = arith.constant 0 : index
    %c46 = arith.constant 46 : index
    %535 = memref.load %arg4[%c0_246, %c46] : memref<2x49xf32, #tpu.memory_space<smem>>
    %536 = vector.broadcast %535 : f32 to vector<1x256xf32>
    %537 = arith.mulf %536, %28 : vector<1x256xf32>
    %c1_247 = arith.constant 1 : index
    %c46_248 = arith.constant 46 : index
    %538 = memref.load %arg4[%c1_247, %c46_248] : memref<2x49xf32, #tpu.memory_space<smem>>
    %539 = vector.broadcast %538 : f32 to vector<1x256xf32>
    %540 = arith.mulf %539, %30 : vector<1x256xf32>
    %541 = arith.addf %537, %540 : vector<1x256xf32>
    %c207_i32 = arith.constant 207 : i32
    %542 = tpu.dynamic_rotate %541 by %c207_i32 dim 1 : vector<1x256xf32>, i32 -> vector<1x256xf32>
    %c46_249 = arith.constant 46 : index
    %c0_250 = arith.constant 0 : index
    %543 = vector.load %arg5[%c46_249, %c0_250] : memref<49x256xf32, #tpu.memory_space<vmem>>, vector<1x256xf32>
    %544 = arith.mulf %542, %543 : vector<1x256xf32>
    %545 = arith.addf %534, %544 : vector<1x256xf32>
    %c0_251 = arith.constant 0 : index
    %c47 = arith.constant 47 : index
    %546 = memref.load %arg4[%c0_251, %c47] : memref<2x49xf32, #tpu.memory_space<smem>>
    %547 = vector.broadcast %546 : f32 to vector<1x256xf32>
    %548 = arith.mulf %547, %28 : vector<1x256xf32>
    %c1_252 = arith.constant 1 : index
    %c47_253 = arith.constant 47 : index
    %549 = memref.load %arg4[%c1_252, %c47_253] : memref<2x49xf32, #tpu.memory_space<smem>>
    %550 = vector.broadcast %549 : f32 to vector<1x256xf32>
    %551 = arith.mulf %550, %30 : vector<1x256xf32>
    %552 = arith.addf %548, %551 : vector<1x256xf32>
    %c206_i32 = arith.constant 206 : i32
    %553 = tpu.dynamic_rotate %552 by %c206_i32 dim 1 : vector<1x256xf32>, i32 -> vector<1x256xf32>
    %c47_254 = arith.constant 47 : index
    %c0_255 = arith.constant 0 : index
    %554 = vector.load %arg5[%c47_254, %c0_255] : memref<49x256xf32, #tpu.memory_space<vmem>>, vector<1x256xf32>
    %555 = arith.mulf %553, %554 : vector<1x256xf32>
    %556 = arith.addf %545, %555 : vector<1x256xf32>
    %c0_256 = arith.constant 0 : index
    %c48 = arith.constant 48 : index
    %557 = memref.load %arg4[%c0_256, %c48] : memref<2x49xf32, #tpu.memory_space<smem>>
    %558 = vector.broadcast %557 : f32 to vector<1x256xf32>
    %559 = arith.mulf %558, %28 : vector<1x256xf32>
    %c1_257 = arith.constant 1 : index
    %c48_258 = arith.constant 48 : index
    %560 = memref.load %arg4[%c1_257, %c48_258] : memref<2x49xf32, #tpu.memory_space<smem>>
    %561 = vector.broadcast %560 : f32 to vector<1x256xf32>
    %562 = arith.mulf %561, %30 : vector<1x256xf32>
    %563 = arith.addf %559, %562 : vector<1x256xf32>
    %c205_i32 = arith.constant 205 : i32
    %564 = tpu.dynamic_rotate %563 by %c205_i32 dim 1 : vector<1x256xf32>, i32 -> vector<1x256xf32>
    %c48_259 = arith.constant 48 : index
    %c0_260 = arith.constant 0 : index
    %565 = vector.load %arg5[%c48_259, %c0_260] : memref<49x256xf32, #tpu.memory_space<vmem>>, vector<1x256xf32>
    %566 = arith.mulf %564, %565 : vector<1x256xf32>
    %567 = arith.addf %556, %566 : vector<1x256xf32>
    %568 = arith.negf %567 : vector<1x256xf32>
    %569 = math.exp %568 : vector<1x256xf32>
    %cst_261 = arith.constant 1.000000e+00 : f32
    %570 = vector.broadcast %cst_261 : f32 to vector<1x256xf32>
    %571 = arith.addf %570, %569 : vector<1x256xf32>
    %572 = arith.divf %570, %571 : vector<1x256xf32>
    %573 = vector.broadcast %572 : vector<1x256xf32> to vector<8x256xf32>
    %574 = arith.mulf %24, %573 : vector<8x256xf32>
    %c0_262 = arith.constant 0 : index
    %c0_263 = arith.constant 0 : index
    %c0_264 = arith.constant 0 : index
    %575 = vector.load %arg6[%c0_262, %c0_263, %c0_264] : memref<1x8x256xf32, #tpu.memory_space<vmem>>, vector<1x8x256xf32>
    %576 = vector.shape_cast %575 : vector<1x8x256xf32> to vector<8x256xf32>
    %577 = vector.shape_cast %574 : vector<8x256xf32> to vector<1x8x256xf32>
    tpu.vector_store %arg6[%c0_262, %c0_263, %c0_264], %577 {strides = array<i32>} : memref<1x8x256xf32, #tpu.memory_space<vmem>>, vector<1x8x256xf32>,
    return
  }
  func.func @transform_0(%arg0: i32) -> (i32, i32, i32) {
    %c0_i32 = arith.constant 0 : i32
    %c0_i32_0 = arith.constant 0 : i32
    %c0_i32_1 = arith.constant 0 : i32
    return %arg0, %c0_i32, %c0_i32_0 : i32, i32, i32
  }
  func.func @transform_1(%arg0: i32) -> (i32, i32) {
    %c0_i32 = arith.constant 0 : i32
    %c0_i32_0 = arith.constant 0 : i32
    %c0_i32_1 = arith.constant 0 : i32
    return %c0_i32, %c0_i32_0 : i32, i32
  }
  func.func @transform_2(%arg0: i32) -> (i32, i32) {
    %c0_i32 = arith.constant 0 : i32
    %c0_i32_0 = arith.constant 0 : i32
    %c0_i32_1 = arith.constant 0 : i32
    return %c0_i32, %c0_i32_0 : i32, i32
  }
  func.func @transform_3(%arg0: i32) -> (i32, i32) {
    %c0_i32 = arith.constant 0 : i32
    %c0_i32_0 = arith.constant 0 : i32
    %c0_i32_1 = arith.constant 0 : i32
    return %c0_i32, %c0_i32_0 : i32, i32
  }
  func.func @transform_4(%arg0: i32) -> (i32, i32) {
    %c0_i32 = arith.constant 0 : i32
    %c0_i32_0 = arith.constant 0 : i32
    %c0_i32_1 = arith.constant 0 : i32
    return %c0_i32, %c0_i32_0 : i32, i32
  }
  func.func @transform_5(%arg0: i32) -> (i32, i32, i32) {
    %c0_i32 = arith.constant 0 : i32
    %c0_i32_0 = arith.constant 0 : i32
    %c0_i32_1 = arith.constant 0 : i32
    return %arg0, %c0_i32, %c0_i32_0 : i32, i32, i32
  }
}

</mosaic_0001>

<llo_original>
// kernel: tpu_custom_call.1
$region0: #{tpu_custom_call.1}
  #allocation0 [shape = 'u32[]', space=smem, size = 0x4, offset = 0x4, fixed_abs, tag = 'smem constant byte address 0x4 - core index']
  #allocation1 [shape = 'u32[144,128]{1,0:T(1,128)}', space=vmem, size = 0x12000, scoped, tag = 'internal scratch']
  %s0 = inlined_call_operand.hbm [shape: f32[2,8,256], index: 0, kind: input, shape index: {}]
  %s1 = inlined_call_operand.vmem [shape: f32[4,8], index: 1, kind: input, shape index: {}]
  %s2 = inlined_call_operand.vmem [shape: f32[8,4], index: 2, kind: input, shape index: {}]
  %s3 = inlined_call_operand.vmem [shape: f32[2,49], index: 3, kind: input, shape index: {}]
  %s4 = inlined_call_operand.hbm [shape: f32[49,256], index: 4, kind: input, shape index: {}]
  %s5 = inlined_call_operand.hbm [shape: f32[2,8,256], index: 5, kind: output, shape index: {}]
  %s6 = sld [smem:[#allocation0]]
  $region65: #{tpu_custom_call.1} parent=0
    _
  %s8 = ssub.s32 1, %s6
  %s9 = scalar_select 0, %s8, %s6
  $region1: #{tpu_custom_call.1} parent=0
    #allocation2 [shape = 'u8[16384]{0}', space=vmem, size = 0x4000, scoped, tag = 'input window, operand 0']
    #allocation3 [shape = 's32[2]{0}', space=sflag, size = 0x8, scoped, tag = 'scoped memory for tpu_custom_call.1']
    #allocation4 [shape = 's32[2]{0}', space=sflag, size = 0x8, scoped, tag = 'scoped memory for tpu_custom_call.1']
    #allocation5 [shape = 's32[2]{0}', space=sflag, size = 0x8, scoped, tag = 'scoped memory for tpu_custom_call.1']
    #allocation6 [shape = 'u8[1024]{0}', space=smem, size = 0x400, scoped, tag = 'input window, operand 3, single buffered']
    #allocation7 [shape = 'u8[57344]{0}', space=vmem, size = 0xe000, scoped, tag = 'input window, operand 4, single buffered']
    #allocation8 [shape = 's32[1]{0}', space=sflag, size = 0x4, scoped, tag = 'scoped memory for tpu_custom_call.1']
    #allocation9 [shape = 'u8[16384]{0}', space=vmem, size = 0x4000, scoped, tag = 'output window, operand 0']
    %10 = vsyncpa [#allocation3], 0
    %s11 = scalar_lea.sflag [#allocation3], 1
    %12 = vsyncpa %s11, 0
    %13 = vsyncpa [#allocation5], 0
    %14 = vsyncpa [#allocation8], 0
    %15 = vsyncpa [#allocation4], 0
    %s16 = scalar_lea.sflag [#allocation4], 1
    %17 = vsyncpa %s16, 0
    loop: start=0, step=1, limit=4
    $region2: #{tpu_custom_call.1} parent=1 // loop_pre_header
      _
    $region3: #{tpu_custom_call.1} parent=1 // loop_header
      %s19 = sphi 0, %s23
      %p20 = scmp.ge.s32.totalorder %s19, 4
      %s29 = sphi 0, %s31
      %s32 = sphi 0, %s29
      %s33 = sphi 0, %s32
      %s49 = sphi 0, %s33
      %s53 = sphi 0, %s53
      %s55 = sphi 0, %s53
      %s56 = sphi 0, %s55
      %s70 = sphi 0, %s56
      %s74 = sphi 0, %s74
      %s76 = sphi 0, %s74
      %s77 = sphi 0, %s76
      %s91 = sphi 0, %s77
      %s95 = sphi 0, %s95
      %s97 = sphi 0, %s95
      %s98 = sphi 0, %s97
      %s112 = sphi 0, %s98
      %s116 = sphi 0, %s116
      %s118 = sphi 0, %s116
      %s119 = sphi 0, %s118
      %s133 = sphi 0, %s119
      %s139 = sphi 0, %s141
      %s142 = sphi 0, %s139
      %s143 = sphi 0, %s142
      %s159 = sphi 0, %s143
    $region4: #{tpu_custom_call.1} parent=1 // loop_header_branch
      %22 = sbr.rel (%p20) target = $region8
    $region5: #{tpu_custom_call.1} parent=1 // loop_body
      %s24 = ssub.s32 %s19, 1
      %s25 = ssub.s32 %s19, 2
      %s26 = sadd.s32 %s19, 1
      %s27 = ssub.s32 %s19, %s26
      %p28 = scmp.eq.s32.totalorder %s27, 0
      %s30 = sadd.s32 %s29, 1
      %s31 = scalar_select %p28, %s29, %s30
      %p34 = pneg %p28
      %p35 = scmp.eq.s32.totalorder %s19, 1
      %p36 = por %p34, %p35
      %p37 = scmp.ne.s32.totalorder %s29, %s32
      %p38 = scmp.eq.s32.totalorder %s19, 0
      %p39 = por %p37, %p38
      %p40 = scmp.ne.s32.totalorder %s29, %s32
      %p41 = scmp.eq.s32.totalorder %s24, 1
      %p42 = por %p40, %p41
      %p43 = scmp.ne.s32.totalorder %s32, %s33
      %p44 = scmp.eq.s32.totalorder %s24, 0
      %p45 = por %p43, %p44
      %p46 = scmp.ne.s32.totalorder %s32, %s33
      %p47 = scmp.eq.s32.totalorder %s25, 1
      %p48 = por %p46, %p47
      %p50 = scmp.ne.s32.totalorder %s33, %s49
      %p51 = scmp.eq.s32.totalorder %s25, 0
      %p52 = por %p50, %p51
      %s54 = sadd.s32 %s53, 1
      %p57 = scmp.eq.s32.totalorder %s19, 1
      %p58 = scmp.ne.s32.totalorder %s53, %s55
      %p59 = scmp.eq.s32.totalorder %s19, 0
      %p60 = por %p58, %p59
      %p61 = scmp.ne.s32.totalorder %s53, %s55
      %p62 = scmp.eq.s32.totalorder %s24, 1
      %p63 = por %p61, %p62
      %p64 = scmp.ne.s32.totalorder %s55, %s56
      %p65 = scmp.eq.s32.totalorder %s24, 0
      %p66 = por %p64, %p65
      %p67 = scmp.ne.s32.totalorder %s55, %s56
      %p68 = scmp.eq.s32.totalorder %s25, 1
      %p69 = por %p67, %p68
      %p71 = scmp.ne.s32.totalorder %s56, %s70
      %p72 = scmp.eq.s32.totalorder %s25, 0
      %p73 = por %p71, %p72
      %s75 = sadd.s32 %s74, 1
      %p78 = scmp.eq.s32.totalorder %s19, 1
      %p79 = scmp.ne.s32.totalorder %s74, %s76
      %p80 = scmp.eq.s32.totalorder %s19, 0
      %p81 = por %p79, %p80
      %p82 = scmp.ne.s32.totalorder %s74, %s76
      %p83 = scmp.eq.s32.totalorder %s24, 1
      %p84 = por %p82, %p83
      %p85 = scmp.ne.s32.totalorder %s76, %s77
      %p86 = scmp.eq.s32.totalorder %s24, 0
      %p87 = por %p85, %p86
      %p88 = scmp.ne.s32.totalorder %s76, %s77
      %p89 = scmp.eq.s32.totalorder %s25, 1
      %p90 = por %p88, %p89
      %p92 = scmp.ne.s32.totalorder %s77, %s91
      %p93 = scmp.eq.s32.totalorder %s25, 0
      %p94 = por %p92, %p93
      %s96 = sadd.s32 %s95, 1
      %p99 = scmp.eq.s32.totalorder %s19, 1
      %p100 = scmp.ne.s32.totalorder %s95, %s97
      %p101 = scmp.eq.s32.totalorder %s19, 0
      %p102 = por %p100, %p101
      %p103 = scmp.ne.s32.totalorder %s95, %s97
      %p104 = scmp.eq.s32.totalorder %s24, 1
      %p105 = por %p103, %p104
      %p106 = scmp.ne.s32.totalorder %s97, %s98
      %p107 = scmp.eq.s32.totalorder %s24, 0
      %p108 = por %p106, %p107
      %p109 = scmp.ne.s32.totalorder %s97, %s98
      %p110 = scmp.eq.s32.totalorder %s25, 1
      %p111 = por %p109, %p110
      %p113 = scmp.ne.s32.totalorder %s98, %s112
      %p114 = scmp.eq.s32.totalorder %s25, 0
      %p115 = por %p113, %p114
      %s117 = sadd.s32 %s116, 1
      %p120 = scmp.eq.s32.totalorder %s19, 1
      %p121 = scmp.ne.s32.totalorder %s116, %s118
      %p122 = scmp.eq.s32.totalorder %s19, 0
      %p123 = por %p121, %p122
      %p124 = scmp.ne.s32.totalorder %s116, %s118
      %p125 = scmp.eq.s32.totalorder %s24, 1
      %p126 = por %p124, %p125
      %p127 = scmp.ne.s32.totalorder %s118, %s119
      %p128 = scmp.eq.s32.totalorder %s24, 0
      %p129 = por %p127, %p128
      %p130 = scmp.ne.s32.totalorder %s118, %s119
      %p131 = scmp.eq.s32.totalorder %s25, 1
      %p132 = por %p130, %p131
      %p134 = scmp.ne.s32.totalorder %s119, %s133
      %p135 = scmp.eq.s32.totalorder %s25, 0
      %p136 = por %p134, %p135
      %s137 = ssub.s32 %s19, %s26
      %p138 = scmp.eq.s32.totalorder %s137, 0
      %s140 = sadd.s32 %s139, 1
      %s141 = scalar_select %p138, %s139, %s140
      %p144 = pneg %p138
      %p145 = scmp.eq.s32.totalorder %s19, 1
      %p146 = por %p144, %p145
      %p147 = scmp.ne.s32.totalorder %s139, %s142
      %p148 = scmp.eq.s32.totalorder %s19, 0
      %p149 = por %p147, %p148
      %p150 = scmp.ne.s32.totalorder %s139, %s142
      %p151 = scmp.eq.s32.totalorder %s24, 1
      %p152 = por %p150, %p151
      %p153 = scmp.ne.s32.totalorder %s142, %s143
      %p154 = scmp.eq.s32.totalorder %s24, 0
      %p155 = por %p153, %p154
      %p156 = scmp.ne.s32.totalorder %s142, %s143
      %p157 = scmp.eq.s32.totalorder %s25, 1
      %p158 = por %p156, %p157
      %p160 = scmp.ne.s32.totalorder %s143, %s159
      %p161 = scmp.eq.s32.totalorder %s25, 0
      %p162 = por %p160, %p161
      %p163 = scmp.le.s32.totalorder 1, %s19
      %p164 = scmp.lt.s32.totalorder %s19, 3
      %p165 = pnand %p163, %p164
      %p166 = pneg %p165
      // Predicated region
      $region9: #{tpu_custom_call.1} parent=5 // pred_check
        _
      $region10: #{tpu_custom_call.1} parent=5 // pred_check_branch
        %168 = sbr.rel (%p165) target = $region12
      $region11: #{tpu_custom_call.1} parent=5 // pred_region
        %s169 = ssub.s32 %s19, 1
        // Predicated region
        $region13: #{tpu_custom_call.1} parent=11 // pred_check
          %p170 = pneg %p66
        $region14: #{tpu_custom_call.1} parent=11 // pred_check_branch
          %172 = sbr.rel (%p170) target = $region16
        $region15: #{tpu_custom_call.1} parent=11 // pred_region
          _
        $region16: #{tpu_custom_call.1} parent=11 // pred_fallthru
          _
        // Predicated region
        $region17: #{tpu_custom_call.1} parent=11 // pred_check
          %p173 = pneg %p87
        $region18: #{tpu_custom_call.1} parent=11 // pred_check_branch
          %175 = sbr.rel (%p173) target = $region20
        $region19: #{tpu_custom_call.1} parent=11 // pred_region
          _
        $region20: #{tpu_custom_call.1} parent=11 // pred_fallthru
          _
        // Predicated region
        $region21: #{tpu_custom_call.1} parent=11 // pred_check
          %p176 = pneg %p108
        $region22: #{tpu_custom_call.1} parent=11 // pred_check_branch
          %178 = sbr.rel (%p176) target = $region24
        $region23: #{tpu_custom_call.1} parent=11 // pred_region
          %s180 = ssub.s32 32, 32
          %181 = vsyncadd [#allocation5], %s180
          %s183 = sshll.u32 %s3, 4
          %s184 = int_to_ptr.vmem [resolvable:$true] %s183
          %186 = dma.vmem_to_smem %s184, 32, [#allocation6], [#allocation5]
        $region24: #{tpu_custom_call.1} parent=11 // pred_fallthru
          _
        // Predicated region
        $region25: #{tpu_custom_call.1} parent=11 // pred_check
          %p187 = pneg %p129
        $region26: #{tpu_custom_call.1} parent=11 // pred_check_branch
          %189 = sbr.rel (%p187) target = $region28
        $region27: #{tpu_custom_call.1} parent=11 // pred_region
          %s191 = ssub.s32 1792, 1792
          %192 = vsyncadd [#allocation8], %s191
          %s193 = sshll.u32 [#allocation7], 4
          %s194 = int_to_ptr.vmem [resolvable:$true] %s193
          %199 = dma.hbm_to_vmem [thread:$0]  %s4, 1792, %s194, [#allocation8], 256, 256, 16
        $region28: #{tpu_custom_call.1} parent=11 // pred_fallthru
          _
      $region12: #{tpu_custom_call.1} parent=5 // pred_fallthru
        _
      %p200 = scmp.lt.s32.totalorder %s19, 2
      // Predicated region
      $region29: #{tpu_custom_call.1} parent=5 // pred_check
        %p201 = pneg %p200
      $region30: #{tpu_custom_call.1} parent=5 // pred_check_branch
        %203 = sbr.rel (%p201) target = $region32
      $region31: #{tpu_custom_call.1} parent=5 // pred_region
        // Predicated region
        $region33: #{tpu_custom_call.1} parent=31 // pred_check
          %p204 = pneg %p39
        $region34: #{tpu_custom_call.1} parent=31 // pred_check_branch
          %206 = sbr.rel (%p204) target = $region36
        $region35: #{tpu_custom_call.1} parent=31 // pred_region
          %s207 = sand.u32 %s29, 1
          %s208 = scalar_lea.sflag [#allocation3], %s207
          %s209 = sand.u32 %s29, 1
          %s210 = smul.addr %s209, 16
          %s211 = scalar_lea.vmem [#allocation2], %s210
          %s213 = ssub.s32 256, 256
          %214 = vsyncadd %s208, %s213
          %s215 = smul.addr %s19, 2
          %s216 = smul.addr %s215, 128
          %s217 = scalar_lea.hbm %s0, %s216
          %s219 = sshll.u32 %s211, 4
          %s220 = int_to_ptr.vmem [resolvable:$true] %s219
          %222 = dma.hbm_to_vmem [thread:$0]  %s217, 256, %s220, %s208
        $region36: #{tpu_custom_call.1} parent=31 // pred_fallthru
          _
      $region32: #{tpu_custom_call.1} parent=5 // pred_fallthru
        _
      %p223 = scmp.le.s32.totalorder 1, %s19
      %p224 = scmp.lt.s32.totalorder %s19, 3
      %p225 = pnand %p223, %p224
      %p226 = pneg %p225
      // Predicated region
      $region37: #{tpu_custom_call.1} parent=5 // pred_check
        _
      $region38: #{tpu_custom_call.1} parent=5 // pred_check_branch
        %228 = sbr.rel (%p225) target = $region40
      $region39: #{tpu_custom_call.1} parent=5 // pred_region
        %s229 = ssub.s32 %s19, 1
        %s230 = sand.u32 %s32, 1
        %s231 = scalar_lea.sflag [#allocation3], %s230
        %s232 = sand.u32 %s32, 1
        %s233 = smul.addr %s232, 16
        %s234 = scalar_lea.vmem [#allocation2], %s233
        // Predicated region
        $region41: #{tpu_custom_call.1} parent=39 // pred_check
          %p235 = pneg %p45
        $region42: #{tpu_custom_call.1} parent=39 // pred_check_branch
          %237 = sbr.rel (%p235) target = $region44
        $region43: #{tpu_custom_call.1} parent=39 // pred_region
          %238 = dma.done %s231, 256
        $region44: #{tpu_custom_call.1} parent=39 // pred_fallthru
          _
        // Predicated region
        $region45: #{tpu_custom_call.1} parent=39 // pred_check
          %p239 = pneg %p108
        $region46: #{tpu_custom_call.1} parent=39 // pred_check_branch
          %241 = sbr.rel (%p239) target = $region48
        $region47: #{tpu_custom_call.1} parent=39 // pred_region
          %242 = dma.done [#allocation5], 32
        $region48: #{tpu_custom_call.1} parent=39 // pred_fallthru
          _
        // Predicated region
        $region49: #{tpu_custom_call.1} parent=39 // pred_check
          %p243 = pneg %p129
        $region50: #{tpu_custom_call.1} parent=39 // pred_check_branch
          %245 = sbr.rel (%p243) target = $region52
        $region51: #{tpu_custom_call.1} parent=39 // pred_region
          %246 = dma.done [#allocation8], 1792
        $region52: #{tpu_custom_call.1} parent=39 // pred_fallthru
          _
        %247 = sfence
        %s248 = sand.u32 %s32, 1
        %s249 = scalar_lea.sflag [#allocation3], %s248
        %s250 = sand.u32 %s32, 1
        %s251 = smul.addr %s250, 16
        %s252 = scalar_lea.vmem [#allocation2], %s251
        %p253 = pneg %p45
        %p254 = pneg %p42
        %p255 = pneg %p66
        %p256 = pneg %p63
        %p257 = pneg %p87
        %p258 = pneg %p84
        %p259 = pneg %p108
        %p260 = pneg %p105
        %p261 = pneg %p129
        %p262 = pneg %p126
        %p263 = pneg %p155
        %p264 = pneg %p152
        %s265 = sand.u32 %s142, 1
        %s266 = scalar_lea.sflag [#allocation4], %s265
        %s267 = sand.u32 %s142, 1
        %s268 = smul.addr %s267, 16
        %s269 = scalar_lea.vmem [#allocation9], %s268
        %v270 = vld [vmem:[%s234] sm:$0xff]
        %v271 = vld [vmem:[%s234 + $0x8] sm:$0xff]
        %v272 = vadd.f32 %v270, %v271
        %273 = vadd.xlane.f32.xlu0 %v272
        %v274 = vpop.xlane.xlu0 %273
        %v275 = vrcp.pop 256.0
        %v276 = vmul.f32 %v274, %v275
        %v277 = vmax.f32 %v270, %v271
        %278 = vmax.xlane.f32.xlu0 %v277
        %v279 = vpop.xlane.xlu0 %278
        %vm280 = vcmask 7168
        %v281 = vsel %vm280, %v276, %v279
        %v282 = vld [vmem:[%s1] sm:$0xf]
        %vm283 = vcmask 64512
        %v285 = vsel %vm283, %v282, 0
        %287 = vmatprep.subr.mxu0 0.0
        %288 = vmatpush1.msra.mxu0 %v281
        %289 = vmatprep.subr.mxu0 0.0
        %290 = vmatpush1.msra.mxu0 0.0
        %291 = vmatprep.subr.mxu0 0.0
        %292 = vmatpush1.msra.mxu0 0.0
        %293 = vmatprep.subr.mxu0 0.0
        %294 = vmatpush1.msra.mxu0 0.0
        %295 = vmatprep.subr.mxu0 0.0
        %296 = vmatpush1.msra.mxu0 0.0
        %297 = vmatprep.subr.mxu0 0.0
        %298 = vmatpush1.msra.mxu0 0.0
        %299 = vmatprep.subr.mxu0 0.0
        %300 = vmatpush1.msra.mxu0 0.0
        %301 = vmatprep.subr.mxu0 0.0
        %302 = vmatpush1.msra.mxu0 0.0
        %303 = vmatprep.subr.mxu0 0.0
        %304 = vmatpush1.msra.mxu0 0.0
        %305 = vmatprep.subr.mxu0 0.0
        %306 = vmatpush1.msra.mxu0 0.0
        %307 = vmatprep.subr.mxu0 0.0
        %308 = vmatpush1.msra.mxu0 0.0
        %309 = vmatprep.subr.mxu0 0.0
        %310 = vmatpush1.msra.mxu0 0.0
        %311 = vmatprep.subr.mxu0 0.0
        %312 = vmatpush1.msra.mxu0 0.0
        %313 = vmatprep.subr.mxu0 0.0
        %314 = vmatpush1.msra.mxu0 0.0
        %315 = vmatprep.subr.mxu0 0.0
        %316 = vmatpush1.msra.mxu0 0.0
        %317 = vmatprep.subr.mxu0 0.0
        %318 = vmatpush1.msra.mxu0 0.0
        %319 = vmatprep.subr.mxu0 0.0
        %320 = vmatpush1.msra.mxu0 0.0
        %321 = vmatprep.subr.mxu0 0.0
        %322 = vmatpush1.msra.mxu0 0.0
        %323 = vmatprep.subr.mxu0 0.0
        %324 = vmatpush1.msra.mxu0 0.0
        %325 = vmatprep.subr.mxu0 0.0
        %326 = vmatpush1.msra.mxu0 0.0
        %327 = vmatprep.subr.mxu0 0.0
        %328 = vmatpush1.msra.mxu0 0.0
        %329 = vmatprep.subr.mxu0 0.0
        %330 = vmatpush1.msra.mxu0 0.0
        %331 = vmatprep.subr.mxu0 0.0
        %332 = vmatpush1.msra.mxu0 0.0
        %333 = vmatprep.subr.mxu0 0.0
        %334 = vmatpush1.msra.mxu0 0.0
        %335 = vmatprep.subr.mxu0 0.0
        %336 = vmatpush1.msra.mxu0 0.0
        %337 = vmatprep.subr.mxu0 0.0
        %338 = vmatpush1.msra.mxu0 0.0
        %339 = vmatprep.subr.mxu0 0.0
        %340 = vmatpush1.msra.mxu0 0.0
        %341 = vmatprep.subr.mxu0 0.0
        %342 = vmatpush1.msra.mxu0 0.0
        %343 = vmatprep.subr.mxu0 0.0
        %344 = vmatpush1.msra.mxu0 0.0
        %345 = vmatprep.subr.mxu0 0.0
        %346 = vmatpush1.msra.mxu0 0.0
        %347 = vmatprep.subr.mxu0 0.0
        %348 = vmatpush1.msra.mxu0 0.0
        %349 = vmatprep.subr.mxu0 0.0
        %350 = vmatpush1.msra.mxu0 0.0
        %351 = vmatprep.mubr.f32.mxu0 0.0
        %352 = vmatmul.mubr.f32.gmra.mrb[0].mxu0 %v285
        %v353 = vpop.f32.mrb[0].mxu0
        %v354 = vadd.f32 0.0, %v353
        %v355 = vpop.f32.mrb[0].mxu0
        %356 = vdwg.mxu0
        %v357 = vmax.f32 %v354, 0.0
        %v358 = vld [vmem:[%s2] sm:$0xff]
        %vm359 = vcmask 31744
        %v361 = vsel %vm359, %v358, 0
        %vm363 = vcmask 1043456
        %v365 = vsel %vm363, %v357, 0
        %367 = vmatprep.subr.mxu0 0.0
        %368 = vmatpush1.msra.mxu0 %v365
        %369 = vmatprep.subr.mxu0 0.0
        %370 = vmatpush1.msra.mxu0 0.0
        %371 = vmatprep.subr.mxu0 0.0
        %372 = vmatpush1.msra.mxu0 0.0
        %373 = vmatprep.subr.mxu0 0.0
        %374 = vmatpush1.msra.mxu0 0.0
        %375 = vmatprep.subr.mxu0 0.0
        %376 = vmatpush1.msra.mxu0 0.0
        %377 = vmatprep.subr.mxu0 0.0
        %378 = vmatpush1.msra.mxu0 0.0
        %379 = vmatprep.subr.mxu0 0.0
        %380 = vmatpush1.msra.mxu0 0.0
        %381 = vmatprep.subr.mxu0 0.0
        %382 = vmatpush1.msra.mxu0 0.0
        %383 = vmatprep.subr.mxu0 0.0
        %384 = vmatpush1.msra.mxu0 0.0
        %385 = vmatprep.subr.mxu0 0.0
        %386 = vmatpush1.msra.mxu0 0.0
        %387 = vmatprep.subr.mxu0 0.0
        %388 = vmatpush1.msra.mxu0 0.0
        %389 = vmatprep.subr.mxu0 0.0
        %390 = vmatpush1.msra.mxu0 0.0
        %391 = vmatprep.subr.mxu0 0.0
        %392 = vmatpush1.msra.mxu0 0.0
        %393 = vmatprep.subr.mxu0 0.0
        %394 = vmatpush1.msra.mxu0 0.0
        %395 = vmatprep.subr.mxu0 0.0
        %396 = vmatpush1.msra.mxu0 0.0
        %397 = vmatprep.subr.mxu0 0.0
        %398 = vmatpush1.msra.mxu0 0.0
        %399 = vmatprep.subr.mxu0 0.0
        %400 = vmatpush1.msra.mxu0 0.0
        %401 = vmatprep.subr.mxu0 0.0
        %402 = vmatpush1.msra.mxu0 0.0
        %403 = vmatprep.subr.mxu0 0.0
        %404 = vmatpush1.msra.mxu0 0.0
        %405 = vmatprep.subr.mxu0 0.0
        %406 = vmatpush1.msra.mxu0 0.0
        %407 = vmatprep.subr.mxu0 0.0
        %408 = vmatpush1.msra.mxu0 0.0
        %409 = vmatprep.subr.mxu0 0.0
        %410 = vmatpush1.msra.mxu0 0.0
        %411 = vmatprep.subr.mxu0 0.0
        %412 = vmatpush1.msra.mxu0 0.0
        %413 = vmatprep.subr.mxu0 0.0
        %414 = vmatpush1.msra.mxu0 0.0
        %415 = vmatprep.subr.mxu0 0.0
        %416 = vmatpush1.msra.mxu0 0.0
        %417 = vmatprep.subr.mxu0 0.0
        %418 = vmatpush1.msra.mxu0 0.0
        %419 = vmatprep.subr.mxu0 0.0
        %420 = vmatpush1.msra.mxu0 0.0
        %421 = vmatprep.subr.mxu0 0.0
        %422 = vmatpush1.msra.mxu0 0.0
        %423 = vmatprep.subr.mxu0 0.0
        %424 = vmatpush1.msra.mxu0 0.0
        %425 = vmatprep.subr.mxu0 0.0
        %426 = vmatpush1.msra.mxu0 0.0
        %427 = vmatprep.subr.mxu0 0.0
        %428 = vmatpush1.msra.mxu0 0.0
        %429 = vmatprep.subr.mxu0 0.0
        %430 = vmatpush1.msra.mxu0 0.0
        %431 = vmatprep.mubr.f32.mxu0 0.0
        %432 = vmatmul.mubr.f32.gmra.mrb[0].mxu0 %v361
        %v433 = vpop.f32.mrb[0].mxu0
        %v434 = vadd.f32 0.0, %v433
        %v435 = vpop.f32.mrb[0].mxu0
        %436 = vdwg.mxu0
        %438 = vrot.lane.b32.xlu0 %v434, 127
        %v439 = vpop.permute.xlu0 %438
        %v441 = vadd.f32 %v434, %v439
        %v442 = vxor.u32 %v441, 2147483648
        %v443 = vmul.f32 %v442, 1.442695
        %v444 = vpow.pop %v443
        %v445 = vadd.f32 %v444, 1.0
        %v446 = vrcp.pop %v445
        %v447 = vmul.f32 1.0, %v446
        %449 = vset.pattern.permute.xlu0 0
        %450 = vperm.xlu0 %449, %v447
        %v451 = vpop.permute.xlu0 %450
        %v453 = vmul.f32 %v270, %v451
        %v454 = vmul.f32 %v271, %v451
        %v455 = vrot.slane %v453, 4
        %v456 = vadd.f32 %v453, %v455
        %v457 = vrot.slane %v456, 2
        %v458 = vadd.f32 %v456, %v457
        %v459 = vrot.slane %v458, 1
        %v460 = vadd.f32 %v458, %v459
        %v461 = vrot.slane %v454, 4
        %v462 = vadd.f32 %v454, %v461
        %v463 = vrot.slane %v462, 2
        %v464 = vadd.f32 %v462, %v463
        %v465 = vrot.slane %v464, 1
        %v466 = vadd.f32 %v464, %v465
        %v467 = vrcp.pop 8.0
        %v468 = vmul.f32 %v460, %v467
        %v469 = vmul.f32 %v466, %v467
        %v470 = vrot.slane %v453, 4
        %v471 = vmax.f32 %v453, %v470
        %v472 = vrot.slane %v471, 2
        %v473 = vmax.f32 %v471, %v472
        %v474 = vrot.slane %v473, 1
        %v475 = vmax.f32 %v473, %v474
        %v476 = vrot.slane %v454, 4
        %v477 = vmax.f32 %v454, %v476
        %v478 = vrot.slane %v477, 2
        %v479 = vmax.f32 %v477, %v478
        %v480 = vrot.slane %v479, 1
        %v481 = vmax.f32 %v479, %v480
        %s482 = sld [smem:[#allocation6]]
        %v483 = vstv %s482
        %v484 = vmul.f32 %v483, %v468
        %v485 = vmul.f32 %v483, %v469
        %s486 = sld [smem:[#allocation6 + $0x80]]
        %v487 = vstv %s486
        %v488 = vmul.f32 %v487, %v475
        %v489 = vmul.f32 %v487, %v481
        %v490 = vadd.f32 %v484, %v488
        %v491 = vadd.f32 %v485, %v489
        %492 = vrot.lane.b32.xlu0 %v490, 51
        %v493 = vpop.permute.xlu0 %492
        %494 = vrot.lane.b32.xlu0 %v491, 51
        %v495 = vpop.permute.xlu0 %494
        %v496 = vlaneseq
        %v497 = vand.u32 %v496, 127
        %vm498 = vcmp.lt.s32.totalorder %v497, 51
        %v499 = vsel %vm498, %v493, %v495
        %v500 = vsel %vm498, %v495, %v493
        %v501 = vld [vmem:[#allocation7] ss:$8 sm:$0x3]
        %v503 = vlaneseq
        %v504 = vshrl.u32 %v503, 7
        %v505 = vsub.s32 0, %v504
        %v506 = vrot.slane %v501, %v505
        %v507 = vlaneseq
        %v508 = vshrl.u32 %v507, 7
        %v509 = vsub.s32 1, %v508
        %v510 = vrot.slane %v501, %v509
        %v513 = vmul.f32 %v500, %v506
        %v514 = vmul.f32 %v499, %v510
        %s515 = sld [smem:[#allocation6 + $0x1]]
        %v516 = vstv %s515
        %v517 = vmul.f32 %v516, %v468
        %v518 = vmul.f32 %v516, %v469
        %s519 = sld [smem:[#allocation6 + $0x81]]
        %v520 = vstv %s519
        %v521 = vmul.f32 %v520, %v475
        %v522 = vmul.f32 %v520, %v481
        %v523 = vadd.f32 %v517, %v521
        %v524 = vadd.f32 %v518, %v522
        %525 = vrot.lane.b32.xlu0 %v523, 50
        %v526 = vpop.permute.xlu0 %525
        %527 = vrot.lane.b32.xlu0 %v524, 50
        %v528 = vpop.permute.xlu0 %527
        %vm529 = vcmp.lt.s32.totalorder %v497, 50
        %v530 = vsel %vm529, %v526, %v528
        %v531 = vsel %vm529, %v528, %v526
        %s532 = scalar_lea.vmem [#allocation7], 1
        %v533 = vld [vmem:[%s532] ss:$8 sm:$0x3]
        %v535 = vlaneseq
        %v536 = vshrl.u32 %v535, 7
        %v537 = vsub.s32 0, %v536
        %v538 = vrot.slane %v533, %v537
        %v539 = vlaneseq
        %v540 = vshrl.u32 %v539, 7
        %v541 = vsub.s32 1, %v540
        %v542 = vrot.slane %v533, %v541
        %v545 = vmul.f32 %v531, %v538
        %v546 = vmul.f32 %v530, %v542
        %v547 = vadd.f32 %v513, %v545
        %v548 = vadd.f32 %v514, %v546
        %s549 = sld [smem:[#allocation6 + $0x2]]
        %v550 = vstv %s549
        %v551 = vmul.f32 %v550, %v468
        %v552 = vmul.f32 %v550, %v469
        %s553 = sld [smem:[#allocation6 + $0x82]]
        %v554 = vstv %s553
        %v555 = vmul.f32 %v554, %v475
        %v556 = vmul.f32 %v554, %v481
        %v557 = vadd.f32 %v551, %v555
        %v558 = vadd.f32 %v552, %v556
        %559 = vrot.lane.b32.xlu0 %v557, 49
        %v560 = vpop.permute.xlu0 %559
        %561 = vrot.lane.b32.xlu0 %v558, 49
        %v562 = vpop.permute.xlu0 %561
        %vm563 = vcmp.lt.s32.totalorder %v497, 49
        %v564 = vsel %vm563, %v560, %v562
        %v565 = vsel %vm563, %v562, %v560
        %s566 = scalar_lea.vmem [#allocation7], 2
        %v567 = vld [vmem:[%s566] ss:$8 sm:$0x3]
        %v569 = vlaneseq
        %v570 = vshrl.u32 %v569, 7
        %v571 = vsub.s32 0, %v570
        %v572 = vrot.slane %v567, %v571
        %v573 = vlaneseq
        %v574 = vshrl.u32 %v573, 7
        %v575 = vsub.s32 1, %v574
        %v576 = vrot.slane %v567, %v575
        %v579 = vmul.f32 %v565, %v572
        %v580 = vmul.f32 %v564, %v576
        %v581 = vadd.f32 %v547, %v579
        %v582 = vadd.f32 %v548, %v580
        %s583 = sld [smem:[#allocation6 + $0x3]]
        %v584 = vstv %s583
        %v585 = vmul.f32 %v584, %v468
        %v586 = vmul.f32 %v584, %v469
        %s587 = sld [smem:[#allocation6 + $0x83]]
        %v588 = vstv %s587
        %v589 = vmul.f32 %v588, %v475
        %v590 = vmul.f32 %v588, %v481
        %v591 = vadd.f32 %v585, %v589
        %v592 = vadd.f32 %v586, %v590
        %593 = vrot.lane.b32.xlu0 %v591, 48
        %v594 = vpop.permute.xlu0 %593
        %595 = vrot.lane.b32.xlu0 %v592, 48
        %v596 = vpop.permute.xlu0 %595
        %vm597 = vcmp.lt.s32.totalorder %v497, 48
        %v598 = vsel %vm597, %v594, %v596
        %v599 = vsel %vm597, %v596, %v594
        %s600 = scalar_lea.vmem [#allocation7], 3
        %v601 = vld [vmem:[%s600] ss:$8 sm:$0x3]
        %v603 = vlaneseq
        %v604 = vshrl.u32 %v603, 7
        %v605 = vsub.s32 0, %v604
        %v606 = vrot.slane %v601, %v605
        %v607 = vlaneseq
        %v608 = vshrl.u32 %v607, 7
        %v609 = vsub.s32 1, %v608
        %v610 = vrot.slane %v601, %v609
        %v613 = vmul.f32 %v599, %v606
        %v614 = vmul.f32 %v598, %v610
        %v615 = vadd.f32 %v581, %v613
        %v616 = vadd.f32 %v582, %v614
        %s617 = sld [smem:[#allocation6 + $0x4]]
        %v618 = vstv %s617
        %v619 = vmul.f32 %v618, %v468
        %v620 = vmul.f32 %v618, %v469
        %s621 = sld [smem:[#allocation6 + $0x84]]
        %v622 = vstv %s621
        %v623 = vmul.f32 %v622, %v475
        %v624 = vmul.f32 %v622, %v481
        %v625 = vadd.f32 %v619, %v623
        %v626 = vadd.f32 %v620, %v624
        %627 = vrot.lane.b32.xlu0 %v625, 47
        %v628 = vpop.permute.xlu0 %627
        %629 = vrot.lane.b32.xlu0 %v626, 47
        %v630 = vpop.permute.xlu0 %629
        %vm631 = vcmp.lt.s32.totalorder %v497, 47
        %v632 = vsel %vm631, %v628, %v630
        %v633 = vsel %vm631, %v630, %v628
        %s634 = scalar_lea.vmem [#allocation7], 4
        %v635 = vld [vmem:[%s634] ss:$8 sm:$0x3]
        %v637 = vlaneseq
        %v638 = vshrl.u32 %v637, 7
        %v639 = vsub.s32 0, %v638
        %v640 = vrot.slane %v635, %v639
        %v641 = vlaneseq
        %v642 = vshrl.u32 %v641, 7
        %v643 = vsub.s32 1, %v642
        %v644 = vrot.slane %v635, %v643
        %v647 = vmul.f32 %v633, %v640
        %v648 = vmul.f32 %v632, %v644
        %v649 = vadd.f32 %v615, %v647
        %v650 = vadd.f32 %v616, %v648
        %s651 = sld [smem:[#allocation6 + $0x5]]
        %v652 = vstv %s651
        %v653 = vmul.f32 %v652, %v468
        %v654 = vmul.f32 %v652, %v469
        %s655 = sld [smem:[#allocation6 + $0x85]]
        %v656 = vstv %s655
        %v657 = vmul.f32 %v656, %v475
        %v658 = vmul.f32 %v656, %v481
        %v659 = vadd.f32 %v653, %v657
        %v660 = vadd.f32 %v654, %v658
        %661 = vrot.lane.b32.xlu0 %v659, 46
        %v662 = vpop.permute.xlu0 %661
        %663 = vrot.lane.b32.xlu0 %v660, 46
        %v664 = vpop.permute.xlu0 %663
        %vm665 = vcmp.lt.s32.totalorder %v497, 46
        %v666 = vsel %vm665, %v662, %v664
        %v667 = vsel %vm665, %v664, %v662
        %s668 = scalar_lea.vmem [#allocation7], 5
        %v669 = vld [vmem:[%s668] ss:$8 sm:$0x3]
        %v671 = vlaneseq
        %v672 = vshrl.u32 %v671, 7
        %v673 = vsub.s32 0, %v672
        %v674 = vrot.slane %v669, %v673
        %v675 = vlaneseq
        %v676 = vshrl.u32 %v675, 7
        %v677 = vsub.s32 1, %v676
        %v678 = vrot.slane %v669, %v677
        %v681 = vmul.f32 %v667, %v674
        %v682 = vmul.f32 %v666, %v678
        %v683 = vadd.f32 %v649, %v681
        %v684 = vadd.f32 %v650, %v682
        %s685 = sld [smem:[#allocation6 + $0x6]]
        %v686 = vstv %s685
        %v687 = vmul.f32 %v686, %v468
        %v688 = vmul.f32 %v686, %v469
        %s689 = sld [smem:[#allocation6 + $0x86]]
        %v690 = vstv %s689
        %v691 = vmul.f32 %v690, %v475
        %v692 = vmul.f32 %v690, %v481
        %v693 = vadd.f32 %v687, %v691
        %v694 = vadd.f32 %v688, %v692
        %695 = vrot.lane.b32.xlu0 %v693, 45
        %v696 = vpop.permute.xlu0 %695
        %697 = vrot.lane.b32.xlu0 %v694, 45
        %v698 = vpop.permute.xlu0 %697
        %vm699 = vcmp.lt.s32.totalorder %v497, 45
        %v700 = vsel %vm699, %v696, %v698
        %v701 = vsel %vm699, %v698, %v696
        %s702 = scalar_lea.vmem [#allocation7], 6
        %v703 = vld [vmem:[%s702] ss:$8 sm:$0x3]
        %v705 = vlaneseq
        %v706 = vshrl.u32 %v705, 7
        %v707 = vsub.s32 0, %v706
        %v708 = vrot.slane %v703, %v707
        %v709 = vlaneseq
        %v710 = vshrl.u32 %v709, 7
        %v711 = vsub.s32 1, %v710
        %v712 = vrot.slane %v703, %v711
        %v715 = vmul.f32 %v701, %v708
        %v716 = vmul.f32 %v700, %v712
        %v717 = vadd.f32 %v683, %v715
        %v718 = vadd.f32 %v684, %v716
        %s719 = sld [smem:[#allocation6 + $0x7]]
        %v720 = vstv %s719
        %v721 = vmul.f32 %v720, %v468
        %v722 = vmul.f32 %v720, %v469
        %s723 = sld [smem:[#allocation6 + $0x87]]
        %v724 = vstv %s723
        %v725 = vmul.f32 %v724, %v475
        %v726 = vmul.f32 %v724, %v481
        %v727 = vadd.f32 %v721, %v725
        %v728 = vadd.f32 %v722, %v726
        %729 = vrot.lane.b32.xlu0 %v727, 35
        %v730 = vpop.permute.xlu0 %729
        %731 = vrot.lane.b32.xlu0 %v728, 35
        %v732 = vpop.permute.xlu0 %731
        %vm733 = vcmp.lt.s32.totalorder %v497, 35
        %v734 = vsel %vm733, %v730, %v732
        %v735 = vsel %vm733, %v732, %v730
        %s736 = scalar_lea.vmem [#allocation7], 7
        %v737 = vld [vmem:[%s736] ss:$8 sm:$0x3]
        %v739 = vlaneseq
        %v740 = vshrl.u32 %v739, 7
        %v741 = vsub.s32 0, %v740
        %v742 = vrot.slane %v737, %v741
        %v743 = vlaneseq
        %v744 = vshrl.u32 %v743, 7
        %v745 = vsub.s32 1, %v744
        %v746 = vrot.slane %v737, %v745
        %v749 = vmul.f32 %v735, %v742
        %v750 = vmul.f32 %v734, %v746
        %v751 = vadd.f32 %v717, %v749
        %v752 = vadd.f32 %v718, %v750
        %s753 = sld [smem:[#allocation6 + $0x8]]
        %v754 = vstv %s753
        %v755 = vmul.f32 %v754, %v468
        %v756 = vmul.f32 %v754, %v469
        %s757 = sld [smem:[#allocation6 + $0x88]]
        %v758 = vstv %s757
        %v759 = vmul.f32 %v758, %v475
        %v760 = vmul.f32 %v758, %v481
        %v761 = vadd.f32 %v755, %v759
        %v762 = vadd.f32 %v756, %v760
        %763 = vrot.lane.b32.xlu0 %v761, 34
        %v764 = vpop.permute.xlu0 %763
        %765 = vrot.lane.b32.xlu0 %v762, 34
        %v766 = vpop.permute.xlu0 %765
        %vm767 = vcmp.lt.s32.totalorder %v497, 34
        %v768 = vsel %vm767, %v764, %v766
        %v769 = vsel %vm767, %v766, %v764
        %s770 = scalar_lea.vmem [#allocation7], 16
        %v771 = vld [vmem:[%s770] ss:$8 sm:$0x3]
        %v773 = vlaneseq
        %v774 = vshrl.u32 %v773, 7
        %v775 = vsub.s32 0, %v774
        %v776 = vrot.slane %v771, %v775
        %v777 = vlaneseq
        %v778 = vshrl.u32 %v777, 7
        %v779 = vsub.s32 1, %v778
        %v780 = vrot.slane %v771, %v779
        %v783 = vmul.f32 %v769, %v776
        %v784 = vmul.f32 %v768, %v780
        %v785 = vadd.f32 %v751, %v783
        %v786 = vadd.f32 %v752, %v784
        %s787 = sld [smem:[#allocation6 + $0x9]]
        %v788 = vstv %s787
        %v789 = vmul.f32 %v788, %v468
        %v790 = vmul.f32 %v788, %v469
        %s791 = sld [smem:[#allocation6 + $0x89]]
        %v792 = vstv %s791
        %v793 = vmul.f32 %v792, %v475
        %v794 = vmul.f32 %v792, %v481
        %v795 = vadd.f32 %v789, %v793
        %v796 = vadd.f32 %v790, %v794
        %797 = vrot.lane.b32.xlu0 %v795, 33
        %v798 = vpop.permute.xlu0 %797
        %799 = vrot.lane.b32.xlu0 %v796, 33
        %v800 = vpop.permute.xlu0 %799
        %vm801 = vcmp.lt.s32.totalorder %v497, 33
        %v802 = vsel %vm801, %v798, %v800
        %v803 = vsel %vm801, %v800, %v798
        %s804 = scalar_lea.vmem [#allocation7], 17
        %v805 = vld [vmem:[%s804] ss:$8 sm:$0x3]
        %v807 = vlaneseq
        %v808 = vshrl.u32 %v807, 7
        %v809 = vsub.s32 0, %v808
        %v810 = vrot.slane %v805, %v809
        %v811 = vlaneseq
        %v812 = vshrl.u32 %v811, 7
        %v813 = vsub.s32 1, %v812
        %v814 = vrot.slane %v805, %v813
        %v817 = vmul.f32 %v803, %v810
        %v818 = vmul.f32 %v802, %v814
        %v819 = vadd.f32 %v785, %v817
        %v820 = vadd.f32 %v786, %v818
        %s821 = sld [smem:[#allocation6 + $0xa]]
        %v822 = vstv %s821
        %v823 = vmul.f32 %v822, %v468
        %v824 = vmul.f32 %v822, %v469
        %s825 = sld [smem:[#allocation6 + $0x8a]]
        %v826 = vstv %s825
        %v827 = vmul.f32 %v826, %v475
        %v828 = vmul.f32 %v826, %v481
        %v829 = vadd.f32 %v823, %v827
        %v830 = vadd.f32 %v824, %v828
        %831 = vrot.lane.b32.xlu0 %v829, 32
        %v832 = vpop.permute.xlu0 %831
        %833 = vrot.lane.b32.xlu0 %v830, 32
        %v834 = vpop.permute.xlu0 %833
        %vm835 = vcmp.lt.s32.totalorder %v497, 32
        %v836 = vsel %vm835, %v832, %v834
        %v837 = vsel %vm835, %v834, %v832
        %s838 = scalar_lea.vmem [#allocation7], 18
        %v839 = vld [vmem:[%s838] ss:$8 sm:$0x3]
        %v841 = vlaneseq
        %v842 = vshrl.u32 %v841, 7
        %v843 = vsub.s32 0, %v842
        %v844 = vrot.slane %v839, %v843
        %v845 = vlaneseq
        %v846 = vshrl.u32 %v845, 7
        %v847 = vsub.s32 1, %v846
        %v848 = vrot.slane %v839, %v847
        %v851 = vmul.f32 %v837, %v844
        %v852 = vmul.f32 %v836, %v848
        %v853 = vadd.f32 %v819, %v851
        %v854 = vadd.f32 %v820, %v852
        %s855 = sld [smem:[#allocation6 + $0xb]]
        %v856 = vstv %s855
        %v857 = vmul.f32 %v856, %v468
        %v858 = vmul.f32 %v856, %v469
        %s859 = sld [smem:[#allocation6 + $0x8b]]
        %v860 = vstv %s859
        %v861 = vmul.f32 %v860, %v475
        %v862 = vmul.f32 %v860, %v481
        %v863 = vadd.f32 %v857, %v861
        %v864 = vadd.f32 %v858, %v862
        %865 = vrot.lane.b32.xlu0 %v863, 31
        %v866 = vpop.permute.xlu0 %865
        %867 = vrot.lane.b32.xlu0 %v864, 31
        %v868 = vpop.permute.xlu0 %867
        %vm869 = vcmp.lt.s32.totalorder %v497, 31
        %v870 = vsel %vm869, %v866, %v868
        %v871 = vsel %vm869, %v868, %v866
        %s872 = scalar_lea.vmem [#allocation7], 19
        %v873 = vld [vmem:[%s872] ss:$8 sm:$0x3]
        %v875 = vlaneseq
        %v876 = vshrl.u32 %v875, 7
        %v877 = vsub.s32 0, %v876
        %v878 = vrot.slane %v873, %v877
        %v879 = vlaneseq
        %v880 = vshrl.u32 %v879, 7
        %v881 = vsub.s32 1, %v880
        %v882 = vrot.slane %v873, %v881
        %v885 = vmul.f32 %v871, %v878
        %v886 = vmul.f32 %v870, %v882
        %v887 = vadd.f32 %v853, %v885
        %v888 = vadd.f32 %v854, %v886
        %s889 = sld [smem:[#allocation6 + $0xc]]
        %v890 = vstv %s889
        %v891 = vmul.f32 %v890, %v468
        %v892 = vmul.f32 %v890, %v469
        %s893 = sld [smem:[#allocation6 + $0x8c]]
        %v894 = vstv %s893
        %v895 = vmul.f32 %v894, %v475
        %v896 = vmul.f32 %v894, %v481
        %v897 = vadd.f32 %v891, %v895
        %v898 = vadd.f32 %v892, %v896
        %899 = vrot.lane.b32.xlu0 %v897, 30
        %v900 = vpop.permute.xlu0 %899
        %901 = vrot.lane.b32.xlu0 %v898, 30
        %v902 = vpop.permute.xlu0 %901
        %vm903 = vcmp.lt.s32.totalorder %v497, 30
        %v904 = vsel %vm903, %v900, %v902
        %v905 = vsel %vm903, %v902, %v900
        %s906 = scalar_lea.vmem [#allocation7], 20
        %v907 = vld [vmem:[%s906] ss:$8 sm:$0x3]
        %v909 = vlaneseq
        %v910 = vshrl.u32 %v909, 7
        %v911 = vsub.s32 0, %v910
        %v912 = vrot.slane %v907, %v911
        %v913 = vlaneseq
        %v914 = vshrl.u32 %v913, 7
        %v915 = vsub.s32 1, %v914
        %v916 = vrot.slane %v907, %v915
        %v919 = vmul.f32 %v905, %v912
        %v920 = vmul.f32 %v904, %v916
        %v921 = vadd.f32 %v887, %v919
        %v922 = vadd.f32 %v888, %v920
        %s923 = sld [smem:[#allocation6 + $0xd]]
        %v924 = vstv %s923
        %v925 = vmul.f32 %v924, %v468
        %v926 = vmul.f32 %v924, %v469
        %s927 = sld [smem:[#allocation6 + $0x8d]]
        %v928 = vstv %s927
        %v929 = vmul.f32 %v928, %v475
        %v930 = vmul.f32 %v928, %v481
        %v931 = vadd.f32 %v925, %v929
        %v932 = vadd.f32 %v926, %v930
        %933 = vrot.lane.b32.xlu0 %v931, 29
        %v934 = vpop.permute.xlu0 %933
        %935 = vrot.lane.b32.xlu0 %v932, 29
        %v936 = vpop.permute.xlu0 %935
        %vm937 = vcmp.lt.s32.totalorder %v497, 29
        %v938 = vsel %vm937, %v934, %v936
        %v939 = vsel %vm937, %v936, %v934
        %s940 = scalar_lea.vmem [#allocation7], 21
        %v941 = vld [vmem:[%s940] ss:$8 sm:$0x3]
        %v943 = vlaneseq
        %v944 = vshrl.u32 %v943, 7
        %v945 = vsub.s32 0, %v944
        %v946 = vrot.slane %v941, %v945
        %v947 = vlaneseq
        %v948 = vshrl.u32 %v947, 7
        %v949 = vsub.s32 1, %v948
        %v950 = vrot.slane %v941, %v949
        %v953 = vmul.f32 %v939, %v946
        %v954 = vmul.f32 %v938, %v950
        %v955 = vadd.f32 %v921, %v953
        %v956 = vadd.f32 %v922, %v954
        %s957 = sld [smem:[#allocation6 + $0xe]]
        %v958 = vstv %s957
        %v959 = vmul.f32 %v958, %v468
        %v960 = vmul.f32 %v958, %v469
        %s961 = sld [smem:[#allocation6 + $0x8e]]
        %v962 = vstv %s961
        %v963 = vmul.f32 %v962, %v475
        %v964 = vmul.f32 %v962, %v481
        %v965 = vadd.f32 %v959, %v963
        %v966 = vadd.f32 %v960, %v964
        %967 = vrot.lane.b32.xlu0 %v965, 19
        %v968 = vpop.permute.xlu0 %967
        %969 = vrot.lane.b32.xlu0 %v966, 19
        %v970 = vpop.permute.xlu0 %969
        %vm971 = vcmp.lt.s32.totalorder %v497, 19
        %v972 = vsel %vm971, %v968, %v970
        %v973 = vsel %vm971, %v970, %v968
        %s974 = scalar_lea.vmem [#allocation7], 22
        %v975 = vld [vmem:[%s974] ss:$8 sm:$0x3]
        %v977 = vlaneseq
        %v978 = vshrl.u32 %v977, 7
        %v979 = vsub.s32 0, %v978
        %v980 = vrot.slane %v975, %v979
        %v981 = vlaneseq
        %v982 = vshrl.u32 %v981, 7
        %v983 = vsub.s32 1, %v982
        %v984 = vrot.slane %v975, %v983
        %v987 = vmul.f32 %v973, %v980
        %v988 = vmul.f32 %v972, %v984
        %v989 = vadd.f32 %v955, %v987
        %v990 = vadd.f32 %v956, %v988
        %s991 = sld [smem:[#allocation6 + $0xf]]
        %v992 = vstv %s991
        %v993 = vmul.f32 %v992, %v468
        %v994 = vmul.f32 %v992, %v469
        %s995 = sld [smem:[#allocation6 + $0x8f]]
        %v996 = vstv %s995
        %v997 = vmul.f32 %v996, %v475
        %v998 = vmul.f32 %v996, %v481
        %v999 = vadd.f32 %v993, %v997
        %v1000 = vadd.f32 %v994, %v998
        %1001 = vrot.lane.b32.xlu0 %v999, 18
        %v1002 = vpop.permute.xlu0 %1001
        %1003 = vrot.lane.b32.xlu0 %v1000, 18
        %v1004 = vpop.permute.xlu0 %1003
        %vm1005 = vcmp.lt.s32.totalorder %v497, 18
        %v1006 = vsel %vm1005, %v1002, %v1004
        %v1007 = vsel %vm1005, %v1004, %v1002
        %s1008 = scalar_lea.vmem [#allocation7], 23
        %v1009 = vld [vmem:[%s1008] ss:$8 sm:$0x3]
        %v1011 = vlaneseq
        %v1012 = vshrl.u32 %v1011, 7
        %v1013 = vsub.s32 0, %v1012
        %v1014 = vrot.slane %v1009, %v1013
        %v1015 = vlaneseq
        %v1016 = vshrl.u32 %v1015, 7
        %v1017 = vsub.s32 1, %v1016
        %v1018 = vrot.slane %v1009, %v1017
        %v1021 = vmul.f32 %v1007, %v1014
        %v1022 = vmul.f32 %v1006, %v1018
        %v1023 = vadd.f32 %v989, %v1021
        %v1024 = vadd.f32 %v990, %v1022
        %s1025 = sld [smem:[#allocation6 + $0x10]]
        %v1026 = vstv %s1025
        %v1027 = vmul.f32 %v1026, %v468
        %v1028 = vmul.f32 %v1026, %v469
        %s1029 = sld [smem:[#allocation6 + $0x90]]
        %v1030 = vstv %s1029
        %v1031 = vmul.f32 %v1030, %v475
        %v1032 = vmul.f32 %v1030, %v481
        %v1033 = vadd.f32 %v1027, %v1031
        %v1034 = vadd.f32 %v1028, %v1032
        %1035 = vrot.lane.b32.xlu0 %v1033, 17
        %v1036 = vpop.permute.xlu0 %1035
        %1037 = vrot.lane.b32.xlu0 %v1034, 17
        %v1038 = vpop.permute.xlu0 %1037
        %vm1039 = vcmp.lt.s32.totalorder %v497, 17
        %v1040 = vsel %vm1039, %v1036, %v1038
        %v1041 = vsel %vm1039, %v1038, %v1036
        %s1042 = scalar_lea.vmem [#allocation7], 32
        %v1043 = vld [vmem:[%s1042] ss:$8 sm:$0x3]
        %v1045 = vlaneseq
        %v1046 = vshrl.u32 %v1045, 7
        %v1047 = vsub.s32 0, %v1046
        %v1048 = vrot.slane %v1043, %v1047
        %v1049 = vlaneseq
        %v1050 = vshrl.u32 %v1049, 7
        %v1051 = vsub.s32 1, %v1050
        %v1052 = vrot.slane %v1043, %v1051
        %v1055 = vmul.f32 %v1041, %v1048
        %v1056 = vmul.f32 %v1040, %v1052
        %v1057 = vadd.f32 %v1023, %v1055
        %v1058 = vadd.f32 %v1024, %v1056
        %s1059 = sld [smem:[#allocation6 + $0x11]]
        %v1060 = vstv %s1059
        %v1061 = vmul.f32 %v1060, %v468
        %v1062 = vmul.f32 %v1060, %v469
        %s1063 = sld [smem:[#allocation6 + $0x91]]
        %v1064 = vstv %s1063
        %v1065 = vmul.f32 %v1064, %v475
        %v1066 = vmul.f32 %v1064, %v481
        %v1067 = vadd.f32 %v1061, %v1065
        %v1068 = vadd.f32 %v1062, %v1066
        %1069 = vrot.lane.b32.xlu0 %v1067, 16
        %v1070 = vpop.permute.xlu0 %1069
        %1071 = vrot.lane.b32.xlu0 %v1068, 16
        %v1072 = vpop.permute.xlu0 %1071
        %vm1073 = vcmp.lt.s32.totalorder %v497, 16
        %v1074 = vsel %vm1073, %v1070, %v1072
        %v1075 = vsel %vm1073, %v1072, %v1070
        %s1076 = scalar_lea.vmem [#allocation7], 33
        %v1077 = vld [vmem:[%s1076] ss:$8 sm:$0x3]
        %v1079 = vlaneseq
        %v1080 = vshrl.u32 %v1079, 7
        %v1081 = vsub.s32 0, %v1080
        %v1082 = vrot.slane %v1077, %v1081
        %v1083 = vlaneseq
        %v1084 = vshrl.u32 %v1083, 7
        %v1085 = vsub.s32 1, %v1084
        %v1086 = vrot.slane %v1077, %v1085
        %v1089 = vmul.f32 %v1075, %v1082
        %v1090 = vmul.f32 %v1074, %v1086
        %v1091 = vadd.f32 %v1057, %v1089
        %v1092 = vadd.f32 %v1058, %v1090
        %s1093 = sld [smem:[#allocation6 + $0x12]]
        %v1094 = vstv %s1093
        %v1095 = vmul.f32 %v1094, %v468
        %v1096 = vmul.f32 %v1094, %v469
        %s1097 = sld [smem:[#allocation6 + $0x92]]
        %v1098 = vstv %s1097
        %v1099 = vmul.f32 %v1098, %v475
        %v1100 = vmul.f32 %v1098, %v481
        %v1101 = vadd.f32 %v1095, %v1099
        %v1102 = vadd.f32 %v1096, %v1100
        %1103 = vrot.lane.b32.xlu0 %v1101, 15
        %v1104 = vpop.permute.xlu0 %1103
        %1105 = vrot.lane.b32.xlu0 %v1102, 15
        %v1106 = vpop.permute.xlu0 %1105
        %vm1107 = vcmp.lt.s32.totalorder %v497, 15
        %v1108 = vsel %vm1107, %v1104, %v1106
        %v1109 = vsel %vm1107, %v1106, %v1104
        %s1110 = scalar_lea.vmem [#allocation7], 34
        %v1111 = vld [vmem:[%s1110] ss:$8 sm:$0x3]
        %v1113 = vlaneseq
        %v1114 = vshrl.u32 %v1113, 7
        %v1115 = vsub.s32 0, %v1114
        %v1116 = vrot.slane %v1111, %v1115
        %v1117 = vlaneseq
        %v1118 = vshrl.u32 %v1117, 7
        %v1119 = vsub.s32 1, %v1118
        %v1120 = vrot.slane %v1111, %v1119
        %v1123 = vmul.f32 %v1109, %v1116
        %v1124 = vmul.f32 %v1108, %v1120
        %v1125 = vadd.f32 %v1091, %v1123
        %v1126 = vadd.f32 %v1092, %v1124
        %s1127 = sld [smem:[#allocation6 + $0x13]]
        %v1128 = vstv %s1127
        %v1129 = vmul.f32 %v1128, %v468
        %v1130 = vmul.f32 %v1128, %v469
        %s1131 = sld [smem:[#allocation6 + $0x93]]
        %v1132 = vstv %s1131
        %v1133 = vmul.f32 %v1132, %v475
        %v1134 = vmul.f32 %v1132, %v481
        %v1135 = vadd.f32 %v1129, %v1133
        %v1136 = vadd.f32 %v1130, %v1134
        %1137 = vrot.lane.b32.xlu0 %v1135, 14
        %v1138 = vpop.permute.xlu0 %1137
        %1139 = vrot.lane.b32.xlu0 %v1136, 14
        %v1140 = vpop.permute.xlu0 %1139
        %vm1141 = vcmp.lt.s32.totalorder %v497, 14
        %v1142 = vsel %vm1141, %v1138, %v1140
        %v1143 = vsel %vm1141, %v1140, %v1138
        %s1144 = scalar_lea.vmem [#allocation7], 35
        %v1145 = vld [vmem:[%s1144] ss:$8 sm:$0x3]
        %v1147 = vlaneseq
        %v1148 = vshrl.u32 %v1147, 7
        %v1149 = vsub.s32 0, %v1148
        %v1150 = vrot.slane %v1145, %v1149
        %v1151 = vlaneseq
        %v1152 = vshrl.u32 %v1151, 7
        %v1153 = vsub.s32 1, %v1152
        %v1154 = vrot.slane %v1145, %v1153
        %v1157 = vmul.f32 %v1143, %v1150
        %v1158 = vmul.f32 %v1142, %v1154
        %v1159 = vadd.f32 %v1125, %v1157
        %v1160 = vadd.f32 %v1126, %v1158
        %s1161 = sld [smem:[#allocation6 + $0x14]]
        %v1162 = vstv %s1161
        %v1163 = vmul.f32 %v1162, %v468
        %v1164 = vmul.f32 %v1162, %v469
        %s1165 = sld [smem:[#allocation6 + $0x94]]
        %v1166 = vstv %s1165
        %v1167 = vmul.f32 %v1166, %v475
        %v1168 = vmul.f32 %v1166, %v481
        %v1169 = vadd.f32 %v1163, %v1167
        %v1170 = vadd.f32 %v1164, %v1168
        %1171 = vrot.lane.b32.xlu0 %v1169, 13
        %v1172 = vpop.permute.xlu0 %1171
        %1173 = vrot.lane.b32.xlu0 %v1170, 13
        %v1174 = vpop.permute.xlu0 %1173
        %vm1175 = vcmp.lt.s32.totalorder %v497, 13
        %v1176 = vsel %vm1175, %v1172, %v1174
        %v1177 = vsel %vm1175, %v1174, %v1172
        %s1178 = scalar_lea.vmem [#allocation7], 36
        %v1179 = vld [vmem:[%s1178] ss:$8 sm:$0x3]
        %v1181 = vlaneseq
        %v1182 = vshrl.u32 %v1181, 7
        %v1183 = vsub.s32 0, %v1182
        %v1184 = vrot.slane %v1179, %v1183
        %v1185 = vlaneseq
        %v1186 = vshrl.u32 %v1185, 7
        %v1187 = vsub.s32 1, %v1186
        %v1188 = vrot.slane %v1179, %v1187
        %v1191 = vmul.f32 %v1177, %v1184
        %v1192 = vmul.f32 %v1176, %v1188
        %v1193 = vadd.f32 %v1159, %v1191
        %v1194 = vadd.f32 %v1160, %v1192
        %s1195 = sld [smem:[#allocation6 + $0x15]]
        %v1196 = vstv %s1195
        %v1197 = vmul.f32 %v1196, %v468
        %v1198 = vmul.f32 %v1196, %v469
        %s1199 = sld [smem:[#allocation6 + $0x95]]
        %v1200 = vstv %s1199
        %v1201 = vmul.f32 %v1200, %v475
        %v1202 = vmul.f32 %v1200, %v481
        %v1203 = vadd.f32 %v1197, %v1201
        %v1204 = vadd.f32 %v1198, %v1202
        %1205 = vrot.lane.b32.xlu0 %v1203, 3
        %v1206 = vpop.permute.xlu0 %1205
        %1207 = vrot.lane.b32.xlu0 %v1204, 3
        %v1208 = vpop.permute.xlu0 %1207
        %vm1209 = vcmp.lt.s32.totalorder %v497, 3
        %v1210 = vsel %vm1209, %v1206, %v1208
        %v1211 = vsel %vm1209, %v1208, %v1206
        %s1212 = scalar_lea.vmem [#allocation7], 37
        %v1213 = vld [vmem:[%s1212] ss:$8 sm:$0x3]
        %v1215 = vlaneseq
        %v1216 = vshrl.u32 %v1215, 7
        %v1217 = vsub.s32 0, %v1216
        %v1218 = vrot.slane %v1213, %v1217
        %v1219 = vlaneseq
        %v1220 = vshrl.u32 %v1219, 7
        %v1221 = vsub.s32 1, %v1220
        %v1222 = vrot.slane %v1213, %v1221
        %v1225 = vmul.f32 %v1211, %v1218
        %v1226 = vmul.f32 %v1210, %v1222
        %v1227 = vadd.f32 %v1193, %v1225
        %v1228 = vadd.f32 %v1194, %v1226
        %s1229 = sld [smem:[#allocation6 + $0x16]]
        %v1230 = vstv %s1229
        %v1231 = vmul.f32 %v1230, %v468
        %v1232 = vmul.f32 %v1230, %v469
        %s1233 = sld [smem:[#allocation6 + $0x96]]
        %v1234 = vstv %s1233
        %v1235 = vmul.f32 %v1234, %v475
        %v1236 = vmul.f32 %v1234, %v481
        %v1237 = vadd.f32 %v1231, %v1235
        %v1238 = vadd.f32 %v1232, %v1236
        %1239 = vrot.lane.b32.xlu0 %v1237, 2
        %v1240 = vpop.permute.xlu0 %1239
        %1241 = vrot.lane.b32.xlu0 %v1238, 2
        %v1242 = vpop.permute.xlu0 %1241
        %vm1243 = vcmp.lt.s32.totalorder %v497, 2
        %v1244 = vsel %vm1243, %v1240, %v1242
        %v1245 = vsel %vm1243, %v1242, %v1240
        %s1246 = scalar_lea.vmem [#allocation7], 38
        %v1247 = vld [vmem:[%s1246] ss:$8 sm:$0x3]
        %v1249 = vlaneseq
        %v1250 = vshrl.u32 %v1249, 7
        %v1251 = vsub.s32 0, %v1250
        %v1252 = vrot.slane %v1247, %v1251
        %v1253 = vlaneseq
        %v1254 = vshrl.u32 %v1253, 7
        %v1255 = vsub.s32 1, %v1254
        %v1256 = vrot.slane %v1247, %v1255
        %v1259 = vmul.f32 %v1245, %v1252
        %v1260 = vmul.f32 %v1244, %v1256
        %v1261 = vadd.f32 %v1227, %v1259
        %v1262 = vadd.f32 %v1228, %v1260
        %s1263 = sld [smem:[#allocation6 + $0x17]]
        %v1264 = vstv %s1263
        %v1265 = vmul.f32 %v1264, %v468
        %v1266 = vmul.f32 %v1264, %v469
        %s1267 = sld [smem:[#allocation6 + $0x97]]
        %v1268 = vstv %s1267
        %v1269 = vmul.f32 %v1268, %v475
        %v1270 = vmul.f32 %v1268, %v481
        %v1271 = vadd.f32 %v1265, %v1269
        %v1272 = vadd.f32 %v1266, %v1270
        %1273 = vrot.lane.b32.xlu0 %v1271, 1
        %v1274 = vpop.permute.xlu0 %1273
        %1275 = vrot.lane.b32.xlu0 %v1272, 1
        %v1276 = vpop.permute.xlu0 %1275
        %vm1277 = vcmp.lt.s32.totalorder %v497, 1
        %v1278 = vsel %vm1277, %v1274, %v1276
        %v1279 = vsel %vm1277, %v1276, %v1274
        %s1280 = scalar_lea.vmem [#allocation7], 39
        %v1281 = vld [vmem:[%s1280] ss:$8 sm:$0x3]
        %v1283 = vlaneseq
        %v1284 = vshrl.u32 %v1283, 7
        %v1285 = vsub.s32 0, %v1284
        %v1286 = vrot.slane %v1281, %v1285
        %v1287 = vlaneseq
        %v1288 = vshrl.u32 %v1287, 7
        %v1289 = vsub.s32 1, %v1288
        %v1290 = vrot.slane %v1281, %v1289
        %v1293 = vmul.f32 %v1279, %v1286
        %v1294 = vmul.f32 %v1278, %v1290
        %v1295 = vadd.f32 %v1261, %v1293
        %v1296 = vadd.f32 %v1262, %v1294
        %s1297 = sld [smem:[#allocation6 + $0x18]]
        %v1298 = vstv %s1297
        %v1299 = vmul.f32 %v1298, %v468
        %v1300 = vmul.f32 %v1298, %v469
        %s1301 = sld [smem:[#allocation6 + $0x98]]
        %v1302 = vstv %s1301
        %v1303 = vmul.f32 %v1302, %v475
        %v1304 = vmul.f32 %v1302, %v481
        %v1305 = vadd.f32 %v1299, %v1303
        %v1306 = vadd.f32 %v1300, %v1304
        %s1307 = scalar_lea.vmem [#allocation7], 48
        %v1308 = vld [vmem:[%s1307] ss:$8 sm:$0x3]
        %v1310 = vlaneseq
        %v1311 = vshrl.u32 %v1310, 7
        %v1312 = vsub.s32 0, %v1311
        %v1313 = vrot.slane %v1308, %v1312
        %v1314 = vlaneseq
        %v1315 = vshrl.u32 %v1314, 7
        %v1316 = vsub.s32 1, %v1315
        %v1317 = vrot.slane %v1308, %v1316
        %v1320 = vmul.f32 %v1305, %v1313
        %v1321 = vmul.f32 %v1306, %v1317
        %v1322 = vadd.f32 %v1295, %v1320
        %v1323 = vadd.f32 %v1296, %v1321
        %s1324 = sld [smem:[#allocation6 + $0x19]]
        %v1325 = vstv %s1324
        %v1326 = vmul.f32 %v1325, %v468
        %v1327 = vmul.f32 %v1325, %v469
        %s1328 = sld [smem:[#allocation6 + $0x99]]
        %v1329 = vstv %s1328
        %v1330 = vmul.f32 %v1329, %v475
        %v1331 = vmul.f32 %v1329, %v481
        %v1332 = vadd.f32 %v1326, %v1330
        %v1333 = vadd.f32 %v1327, %v1331
        %1334 = vrot.lane.b32.xlu0 %v1332, 127
        %v1335 = vpop.permute.xlu0 %1334
        %1336 = vrot.lane.b32.xlu0 %v1333, 127
        %v1337 = vpop.permute.xlu0 %1336
        %vm1338 = vcmp.lt.s32.totalorder %v497, 127
        %v1339 = vsel %vm1338, %v1335, %v1337
        %v1340 = vsel %vm1338, %v1337, %v1335
        %s1341 = scalar_lea.vmem [#allocation7], 49
        %v1342 = vld [vmem:[%s1341] ss:$8 sm:$0x3]
        %v1344 = vlaneseq
        %v1345 = vshrl.u32 %v1344, 7
        %v1346 = vsub.s32 0, %v1345
        %v1347 = vrot.slane %v1342, %v1346
        %v1348 = vlaneseq
        %v1349 = vshrl.u32 %v1348, 7
        %v1350 = vsub.s32 1, %v1349
        %v1351 = vrot.slane %v1342, %v1350
        %v1354 = vmul.f32 %v1339, %v1347
        %v1355 = vmul.f32 %v1340, %v1351
        %v1356 = vadd.f32 %v1322, %v1354
        %v1357 = vadd.f32 %v1323, %v1355
        %s1358 = sld [smem:[#allocation6 + $0x1a]]
        %v1359 = vstv %s1358
        %v1360 = vmul.f32 %v1359, %v468
        %v1361 = vmul.f32 %v1359, %v469
        %s1362 = sld [smem:[#allocation6 + $0x9a]]
        %v1363 = vstv %s1362
        %v1364 = vmul.f32 %v1363, %v475
        %v1365 = vmul.f32 %v1363, %v481
        %v1366 = vadd.f32 %v1360, %v1364
        %v1367 = vadd.f32 %v1361, %v1365
        %1368 = vrot.lane.b32.xlu0 %v1366, 126
        %v1369 = vpop.permute.xlu0 %1368
        %1370 = vrot.lane.b32.xlu0 %v1367, 126
        %v1371 = vpop.permute.xlu0 %1370
        %vm1372 = vcmp.lt.s32.totalorder %v497, 126
        %v1373 = vsel %vm1372, %v1369, %v1371
        %v1374 = vsel %vm1372, %v1371, %v1369
        %s1375 = scalar_lea.vmem [#allocation7], 50
        %v1376 = vld [vmem:[%s1375] ss:$8 sm:$0x3]
        %v1378 = vlaneseq
        %v1379 = vshrl.u32 %v1378, 7
        %v1380 = vsub.s32 0, %v1379
        %v1381 = vrot.slane %v1376, %v1380
        %v1382 = vlaneseq
        %v1383 = vshrl.u32 %v1382, 7
        %v1384 = vsub.s32 1, %v1383
        %v1385 = vrot.slane %v1376, %v1384
        %v1388 = vmul.f32 %v1373, %v1381
        %v1389 = vmul.f32 %v1374, %v1385
        %v1390 = vadd.f32 %v1356, %v1388
        %v1391 = vadd.f32 %v1357, %v1389
        %s1392 = sld [smem:[#allocation6 + $0x1b]]
        %v1393 = vstv %s1392
        %v1394 = vmul.f32 %v1393, %v468
        %v1395 = vmul.f32 %v1393, %v469
        %s1396 = sld [smem:[#allocation6 + $0x9b]]
        %v1397 = vstv %s1396
        %v1398 = vmul.f32 %v1397, %v475
        %v1399 = vmul.f32 %v1397, %v481
        %v1400 = vadd.f32 %v1394, %v1398
        %v1401 = vadd.f32 %v1395, %v1399
        %1402 = vrot.lane.b32.xlu0 %v1400, 125
        %v1403 = vpop.permute.xlu0 %1402
        %1404 = vrot.lane.b32.xlu0 %v1401, 125
        %v1405 = vpop.permute.xlu0 %1404
        %vm1406 = vcmp.lt.s32.totalorder %v497, 125
        %v1407 = vsel %vm1406, %v1403, %v1405
        %v1408 = vsel %vm1406, %v1405, %v1403
        %s1409 = scalar_lea.vmem [#allocation7], 51
        %v1410 = vld [vmem:[%s1409] ss:$8 sm:$0x3]
        %v1412 = vlaneseq
        %v1413 = vshrl.u32 %v1412, 7
        %v1414 = vsub.s32 0, %v1413
        %v1415 = vrot.slane %v1410, %v1414
        %v1416 = vlaneseq
        %v1417 = vshrl.u32 %v1416, 7
        %v1418 = vsub.s32 1, %v1417
        %v1419 = vrot.slane %v1410, %v1418
        %v1422 = vmul.f32 %v1407, %v1415
        %v1423 = vmul.f32 %v1408, %v1419
        %v1424 = vadd.f32 %v1390, %v1422
        %v1425 = vadd.f32 %v1391, %v1423
        %s1426 = sld [smem:[#allocation6 + $0x1c]]
        %v1427 = vstv %s1426
        %v1428 = vmul.f32 %v1427, %v468
        %v1429 = vmul.f32 %v1427, %v469
        %s1430 = sld [smem:[#allocation6 + $0x9c]]
        %v1431 = vstv %s1430
        %v1432 = vmul.f32 %v1431, %v475
        %v1433 = vmul.f32 %v1431, %v481
        %v1434 = vadd.f32 %v1428, %v1432
        %v1435 = vadd.f32 %v1429, %v1433
        %1436 = vrot.lane.b32.xlu0 %v1434, 115
        %v1437 = vpop.permute.xlu0 %1436
        %1438 = vrot.lane.b32.xlu0 %v1435, 115
        %v1439 = vpop.permute.xlu0 %1438
        %vm1440 = vcmp.lt.s32.totalorder %v497, 115
        %v1441 = vsel %vm1440, %v1437, %v1439
        %v1442 = vsel %vm1440, %v1439, %v1437
        %s1443 = scalar_lea.vmem [#allocation7], 52
        %v1444 = vld [vmem:[%s1443] ss:$8 sm:$0x3]
        %v1446 = vlaneseq
        %v1447 = vshrl.u32 %v1446, 7
        %v1448 = vsub.s32 0, %v1447
        %v1449 = vrot.slane %v1444, %v1448
        %v1450 = vlaneseq
        %v1451 = vshrl.u32 %v1450, 7
        %v1452 = vsub.s32 1, %v1451
        %v1453 = vrot.slane %v1444, %v1452
        %v1456 = vmul.f32 %v1441, %v1449
        %v1457 = vmul.f32 %v1442, %v1453
        %v1458 = vadd.f32 %v1424, %v1456
        %v1459 = vadd.f32 %v1425, %v1457
        %s1460 = sld [smem:[#allocation6 + $0x1d]]
        %v1461 = vstv %s1460
        %v1462 = vmul.f32 %v1461, %v468
        %v1463 = vmul.f32 %v1461, %v469
        %s1464 = sld [smem:[#allocation6 + $0x9d]]
        %v1465 = vstv %s1464
        %v1466 = vmul.f32 %v1465, %v475
        %v1467 = vmul.f32 %v1465, %v481
        %v1468 = vadd.f32 %v1462, %v1466
        %v1469 = vadd.f32 %v1463, %v1467
        %1470 = vrot.lane.b32.xlu0 %v1468, 114
        %v1471 = vpop.permute.xlu0 %1470
        %1472 = vrot.lane.b32.xlu0 %v1469, 114
        %v1473 = vpop.permute.xlu0 %1472
        %vm1474 = vcmp.lt.s32.totalorder %v497, 114
        %v1475 = vsel %vm1474, %v1471, %v1473
        %v1476 = vsel %vm1474, %v1473, %v1471
        %s1477 = scalar_lea.vmem [#allocation7], 53
        %v1478 = vld [vmem:[%s1477] ss:$8 sm:$0x3]
        %v1480 = vlaneseq
        %v1481 = vshrl.u32 %v1480, 7
        %v1482 = vsub.s32 0, %v1481
        %v1483 = vrot.slane %v1478, %v1482
        %v1484 = vlaneseq
        %v1485 = vshrl.u32 %v1484, 7
        %v1486 = vsub.s32 1, %v1485
        %v1487 = vrot.slane %v1478, %v1486
        %v1490 = vmul.f32 %v1475, %v1483
        %v1491 = vmul.f32 %v1476, %v1487
        %v1492 = vadd.f32 %v1458, %v1490
        %v1493 = vadd.f32 %v1459, %v1491
        %s1494 = sld [smem:[#allocation6 + $0x1e]]
        %v1495 = vstv %s1494
        %v1496 = vmul.f32 %v1495, %v468
        %v1497 = vmul.f32 %v1495, %v469
        %s1498 = sld [smem:[#allocation6 + $0x9e]]
        %v1499 = vstv %s1498
        %v1500 = vmul.f32 %v1499, %v475
        %v1501 = vmul.f32 %v1499, %v481
        %v1502 = vadd.f32 %v1496, %v1500
        %v1503 = vadd.f32 %v1497, %v1501
        %1504 = vrot.lane.b32.xlu0 %v1502, 113
        %v1505 = vpop.permute.xlu0 %1504
        %1506 = vrot.lane.b32.xlu0 %v1503, 113
        %v1507 = vpop.permute.xlu0 %1506
        %vm1508 = vcmp.lt.s32.totalorder %v497, 113
        %v1509 = vsel %vm1508, %v1505, %v1507
        %v1510 = vsel %vm1508, %v1507, %v1505
        %s1511 = scalar_lea.vmem [#allocation7], 54
        %v1512 = vld [vmem:[%s1511] ss:$8 sm:$0x3]
        %v1514 = vlaneseq
        %v1515 = vshrl.u32 %v1514, 7
        %v1516 = vsub.s32 0, %v1515
        %v1517 = vrot.slane %v1512, %v1516
        %v1518 = vlaneseq
        %v1519 = vshrl.u32 %v1518, 7
        %v1520 = vsub.s32 1, %v1519
        %v1521 = vrot.slane %v1512, %v1520
        %v1524 = vmul.f32 %v1509, %v1517
        %v1525 = vmul.f32 %v1510, %v1521
        %v1526 = vadd.f32 %v1492, %v1524
        %v1527 = vadd.f32 %v1493, %v1525
        %s1528 = sld [smem:[#allocation6 + $0x1f]]
        %v1529 = vstv %s1528
        %v1530 = vmul.f32 %v1529, %v468
        %v1531 = vmul.f32 %v1529, %v469
        %s1532 = sld [smem:[#allocation6 + $0x9f]]
        %v1533 = vstv %s1532
        %v1534 = vmul.f32 %v1533, %v475
        %v1535 = vmul.f32 %v1533, %v481
        %v1536 = vadd.f32 %v1530, %v1534
        %v1537 = vadd.f32 %v1531, %v1535
        %1538 = vrot.lane.b32.xlu0 %v1536, 112
        %v1539 = vpop.permute.xlu0 %1538
        %1540 = vrot.lane.b32.xlu0 %v1537, 112
        %v1541 = vpop.permute.xlu0 %1540
        %vm1542 = vcmp.lt.s32.totalorder %v497, 112
        %v1543 = vsel %vm1542, %v1539, %v1541
        %v1544 = vsel %vm1542, %v1541, %v1539
        %s1545 = scalar_lea.vmem [#allocation7], 55
        %v1546 = vld [vmem:[%s1545] ss:$8 sm:$0x3]
        %v1548 = vlaneseq
        %v1549 = vshrl.u32 %v1548, 7
        %v1550 = vsub.s32 0, %v1549
        %v1551 = vrot.slane %v1546, %v1550
        %v1552 = vlaneseq
        %v1553 = vshrl.u32 %v1552, 7
        %v1554 = vsub.s32 1, %v1553
        %v1555 = vrot.slane %v1546, %v1554
        %v1558 = vmul.f32 %v1543, %v1551
        %v1559 = vmul.f32 %v1544, %v1555
        %v1560 = vadd.f32 %v1526, %v1558
        %v1561 = vadd.f32 %v1527, %v1559
        %s1562 = sld [smem:[#allocation6 + $0x20]]
        %v1563 = vstv %s1562
        %v1564 = vmul.f32 %v1563, %v468
        %v1565 = vmul.f32 %v1563, %v469
        %s1566 = sld [smem:[#allocation6 + $0xa0]]
        %v1567 = vstv %s1566
        %v1568 = vmul.f32 %v1567, %v475
        %v1569 = vmul.f32 %v1567, %v481
        %v1570 = vadd.f32 %v1564, %v1568
        %v1571 = vadd.f32 %v1565, %v1569
        %1572 = vrot.lane.b32.xlu0 %v1570, 111
        %v1573 = vpop.permute.xlu0 %1572
        %1574 = vrot.lane.b32.xlu0 %v1571, 111
        %v1575 = vpop.permute.xlu0 %1574
        %vm1576 = vcmp.lt.s32.totalorder %v497, 111
        %v1577 = vsel %vm1576, %v1573, %v1575
        %v1578 = vsel %vm1576, %v1575, %v1573
        %s1579 = scalar_lea.vmem [#allocation7], 64
        %v1580 = vld [vmem:[%s1579] ss:$8 sm:$0x3]
        %v1582 = vlaneseq
        %v1583 = vshrl.u32 %v1582, 7
        %v1584 = vsub.s32 0, %v1583
        %v1585 = vrot.slane %v1580, %v1584
        %v1586 = vlaneseq
        %v1587 = vshrl.u32 %v1586, 7
        %v1588 = vsub.s32 1, %v1587
        %v1589 = vrot.slane %v1580, %v1588
        %v1592 = vmul.f32 %v1577, %v1585
        %v1593 = vmul.f32 %v1578, %v1589
        %v1594 = vadd.f32 %v1560, %v1592
        %v1595 = vadd.f32 %v1561, %v1593
        %s1596 = sld [smem:[#allocation6 + $0x21]]
        %v1597 = vstv %s1596
        %v1598 = vmul.f32 %v1597, %v468
        %v1599 = vmul.f32 %v1597, %v469
        %s1600 = sld [smem:[#allocation6 + $0xa1]]
        %v1601 = vstv %s1600
        %v1602 = vmul.f32 %v1601, %v475
        %v1603 = vmul.f32 %v1601, %v481
        %v1604 = vadd.f32 %v1598, %v1602
        %v1605 = vadd.f32 %v1599, %v1603
        %1606 = vrot.lane.b32.xlu0 %v1604, 110
        %v1607 = vpop.permute.xlu0 %1606
        %1608 = vrot.lane.b32.xlu0 %v1605, 110
        %v1609 = vpop.permute.xlu0 %1608
        %vm1610 = vcmp.lt.s32.totalorder %v497, 110
        %v1611 = vsel %vm1610, %v1607, %v1609
        %v1612 = vsel %vm1610, %v1609, %v1607
        %s1613 = scalar_lea.vmem [#allocation7], 65
        %v1614 = vld [vmem:[%s1613] ss:$8 sm:$0x3]
        %v1616 = vlaneseq
        %v1617 = vshrl.u32 %v1616, 7
        %v1618 = vsub.s32 0, %v1617
        %v1619 = vrot.slane %v1614, %v1618
        %v1620 = vlaneseq
        %v1621 = vshrl.u32 %v1620, 7
        %v1622 = vsub.s32 1, %v1621
        %v1623 = vrot.slane %v1614, %v1622
        %v1626 = vmul.f32 %v1611, %v1619
        %v1627 = vmul.f32 %v1612, %v1623
        %v1628 = vadd.f32 %v1594, %v1626
        %v1629 = vadd.f32 %v1595, %v1627
        %s1630 = sld [smem:[#allocation6 + $0x22]]
        %v1631 = vstv %s1630
        %v1632 = vmul.f32 %v1631, %v468
        %v1633 = vmul.f32 %v1631, %v469
        %s1634 = sld [smem:[#allocation6 + $0xa2]]
        %v1635 = vstv %s1634
        %v1636 = vmul.f32 %v1635, %v475
        %v1637 = vmul.f32 %v1635, %v481
        %v1638 = vadd.f32 %v1632, %v1636
        %v1639 = vadd.f32 %v1633, %v1637
        %1640 = vrot.lane.b32.xlu0 %v1638, 109
        %v1641 = vpop.permute.xlu0 %1640
        %1642 = vrot.lane.b32.xlu0 %v1639, 109
        %v1643 = vpop.permute.xlu0 %1642
        %vm1644 = vcmp.lt.s32.totalorder %v497, 109
        %v1645 = vsel %vm1644, %v1641, %v1643
        %v1646 = vsel %vm1644, %v1643, %v1641
        %s1647 = scalar_lea.vmem [#allocation7], 66
        %v1648 = vld [vmem:[%s1647] ss:$8 sm:$0x3]
        %v1650 = vlaneseq
        %v1651 = vshrl.u32 %v1650, 7
        %v1652 = vsub.s32 0, %v1651
        %v1653 = vrot.slane %v1648, %v1652
        %v1654 = vlaneseq
        %v1655 = vshrl.u32 %v1654, 7
        %v1656 = vsub.s32 1, %v1655
        %v1657 = vrot.slane %v1648, %v1656
        %v1660 = vmul.f32 %v1645, %v1653
        %v1661 = vmul.f32 %v1646, %v1657
        %v1662 = vadd.f32 %v1628, %v1660
        %v1663 = vadd.f32 %v1629, %v1661
        %s1664 = sld [smem:[#allocation6 + $0x23]]
        %v1665 = vstv %s1664
        %v1666 = vmul.f32 %v1665, %v468
        %v1667 = vmul.f32 %v1665, %v469
        %s1668 = sld [smem:[#allocation6 + $0xa3]]
        %v1669 = vstv %s1668
        %v1670 = vmul.f32 %v1669, %v475
        %v1671 = vmul.f32 %v1669, %v481
        %v1672 = vadd.f32 %v1666, %v1670
        %v1673 = vadd.f32 %v1667, %v1671
        %1674 = vrot.lane.b32.xlu0 %v1672, 99
        %v1675 = vpop.permute.xlu0 %1674
        %1676 = vrot.lane.b32.xlu0 %v1673, 99
        %v1677 = vpop.permute.xlu0 %1676
        %vm1678 = vcmp.lt.s32.totalorder %v497, 99
        %v1679 = vsel %vm1678, %v1675, %v1677
        %v1680 = vsel %vm1678, %v1677, %v1675
        %s1681 = scalar_lea.vmem [#allocation7], 67
        %v1682 = vld [vmem:[%s1681] ss:$8 sm:$0x3]
        %v1684 = vlaneseq
        %v1685 = vshrl.u32 %v1684, 7
        %v1686 = vsub.s32 0, %v1685
        %v1687 = vrot.slane %v1682, %v1686
        %v1688 = vlaneseq
        %v1689 = vshrl.u32 %v1688, 7
        %v1690 = vsub.s32 1, %v1689
        %v1691 = vrot.slane %v1682, %v1690
        %v1694 = vmul.f32 %v1679, %v1687
        %v1695 = vmul.f32 %v1680, %v1691
        %v1696 = vadd.f32 %v1662, %v1694
        %v1697 = vadd.f32 %v1663, %v1695
        %s1698 = sld [smem:[#allocation6 + $0x24]]
        %v1699 = vstv %s1698
        %v1700 = vmul.f32 %v1699, %v468
        %v1701 = vmul.f32 %v1699, %v469
        %s1702 = sld [smem:[#allocation6 + $0xa4]]
        %v1703 = vstv %s1702
        %v1704 = vmul.f32 %v1703, %v475
        %v1705 = vmul.f32 %v1703, %v481
        %v1706 = vadd.f32 %v1700, %v1704
        %v1707 = vadd.f32 %v1701, %v1705
        %1708 = vrot.lane.b32.xlu0 %v1706, 98
        %v1709 = vpop.permute.xlu0 %1708
        %1710 = vrot.lane.b32.xlu0 %v1707, 98
        %v1711 = vpop.permute.xlu0 %1710
        %vm1712 = vcmp.lt.s32.totalorder %v497, 98
        %v1713 = vsel %vm1712, %v1709, %v1711
        %v1714 = vsel %vm1712, %v1711, %v1709
        %s1715 = scalar_lea.vmem [#allocation7], 68
        %v1716 = vld [vmem:[%s1715] ss:$8 sm:$0x3]
        %v1718 = vlaneseq
        %v1719 = vshrl.u32 %v1718, 7
        %v1720 = vsub.s32 0, %v1719
        %v1721 = vrot.slane %v1716, %v1720
        %v1722 = vlaneseq
        %v1723 = vshrl.u32 %v1722, 7
        %v1724 = vsub.s32 1, %v1723
        %v1725 = vrot.slane %v1716, %v1724
        %v1728 = vmul.f32 %v1713, %v1721
        %v1729 = vmul.f32 %v1714, %v1725
        %v1730 = vadd.f32 %v1696, %v1728
        %v1731 = vadd.f32 %v1697, %v1729
        %s1732 = sld [smem:[#allocation6 + $0x25]]
        %v1733 = vstv %s1732
        %v1734 = vmul.f32 %v1733, %v468
        %v1735 = vmul.f32 %v1733, %v469
        %s1736 = sld [smem:[#allocation6 + $0xa5]]
        %v1737 = vstv %s1736
        %v1738 = vmul.f32 %v1737, %v475
        %v1739 = vmul.f32 %v1737, %v481
        %v1740 = vadd.f32 %v1734, %v1738
        %v1741 = vadd.f32 %v1735, %v1739
        %1742 = vrot.lane.b32.xlu0 %v1740, 97
        %v1743 = vpop.permute.xlu0 %1742
        %1744 = vrot.lane.b32.xlu0 %v1741, 97
        %v1745 = vpop.permute.xlu0 %1744
        %vm1746 = vcmp.lt.s32.totalorder %v497, 97
        %v1747 = vsel %vm1746, %v1743, %v1745
        %v1748 = vsel %vm1746, %v1745, %v1743
        %s1749 = scalar_lea.vmem [#allocation7], 69
        %v1750 = vld [vmem:[%s1749] ss:$8 sm:$0x3]
        %v1752 = vlaneseq
        %v1753 = vshrl.u32 %v1752, 7
        %v1754 = vsub.s32 0, %v1753
        %v1755 = vrot.slane %v1750, %v1754
        %v1756 = vlaneseq
        %v1757 = vshrl.u32 %v1756, 7
        %v1758 = vsub.s32 1, %v1757
        %v1759 = vrot.slane %v1750, %v1758
        %v1762 = vmul.f32 %v1747, %v1755
        %v1763 = vmul.f32 %v1748, %v1759
        %v1764 = vadd.f32 %v1730, %v1762
        %v1765 = vadd.f32 %v1731, %v1763
        %s1766 = sld [smem:[#allocation6 + $0x26]]
        %v1767 = vstv %s1766
        %v1768 = vmul.f32 %v1767, %v468
        %v1769 = vmul.f32 %v1767, %v469
        %s1770 = sld [smem:[#allocation6 + $0xa6]]
        %v1771 = vstv %s1770
        %v1772 = vmul.f32 %v1771, %v475
        %v1773 = vmul.f32 %v1771, %v481
        %v1774 = vadd.f32 %v1768, %v1772
        %v1775 = vadd.f32 %v1769, %v1773
        %1776 = vrot.lane.b32.xlu0 %v1774, 96
        %v1777 = vpop.permute.xlu0 %1776
        %1778 = vrot.lane.b32.xlu0 %v1775, 96
        %v1779 = vpop.permute.xlu0 %1778
        %vm1780 = vcmp.lt.s32.totalorder %v497, 96
        %v1781 = vsel %vm1780, %v1777, %v1779
        %v1782 = vsel %vm1780, %v1779, %v1777
        %s1783 = scalar_lea.vmem [#allocation7], 70
        %v1784 = vld [vmem:[%s1783] ss:$8 sm:$0x3]
        %v1786 = vlaneseq
        %v1787 = vshrl.u32 %v1786, 7
        %v1788 = vsub.s32 0, %v1787
        %v1789 = vrot.slane %v1784, %v1788
        %v1790 = vlaneseq
        %v1791 = vshrl.u32 %v1790, 7
        %v1792 = vsub.s32 1, %v1791
        %v1793 = vrot.slane %v1784, %v1792
        %v1796 = vmul.f32 %v1781, %v1789
        %v1797 = vmul.f32 %v1782, %v1793
        %v1798 = vadd.f32 %v1764, %v1796
        %v1799 = vadd.f32 %v1765, %v1797
        %s1800 = sld [smem:[#allocation6 + $0x27]]
        %v1801 = vstv %s1800
        %v1802 = vmul.f32 %v1801, %v468
        %v1803 = vmul.f32 %v1801, %v469
        %s1804 = sld [smem:[#allocation6 + $0xa7]]
        %v1805 = vstv %s1804
        %v1806 = vmul.f32 %v1805, %v475
        %v1807 = vmul.f32 %v1805, %v481
        %v1808 = vadd.f32 %v1802, %v1806
        %v1809 = vadd.f32 %v1803, %v1807
        %1810 = vrot.lane.b32.xlu0 %v1808, 95
        %v1811 = vpop.permute.xlu0 %1810
        %1812 = vrot.lane.b32.xlu0 %v1809, 95
        %v1813 = vpop.permute.xlu0 %1812
        %vm1814 = vcmp.lt.s32.totalorder %v497, 95
        %v1815 = vsel %vm1814, %v1811, %v1813
        %v1816 = vsel %vm1814, %v1813, %v1811
        %s1817 = scalar_lea.vmem [#allocation7], 71
        %v1818 = vld [vmem:[%s1817] ss:$8 sm:$0x3]
        %v1820 = vlaneseq
        %v1821 = vshrl.u32 %v1820, 7
        %v1822 = vsub.s32 0, %v1821
        %v1823 = vrot.slane %v1818, %v1822
        %v1824 = vlaneseq
        %v1825 = vshrl.u32 %v1824, 7
        %v1826 = vsub.s32 1, %v1825
        %v1827 = vrot.slane %v1818, %v1826
        %v1830 = vmul.f32 %v1815, %v1823
        %v1831 = vmul.f32 %v1816, %v1827
        %v1832 = vadd.f32 %v1798, %v1830
        %v1833 = vadd.f32 %v1799, %v1831
        %s1834 = sld [smem:[#allocation6 + $0x28]]
        %v1835 = vstv %s1834
        %v1836 = vmul.f32 %v1835, %v468
        %v1837 = vmul.f32 %v1835, %v469
        %s1838 = sld [smem:[#allocation6 + $0xa8]]
        %v1839 = vstv %s1838
        %v1840 = vmul.f32 %v1839, %v475
        %v1841 = vmul.f32 %v1839, %v481
        %v1842 = vadd.f32 %v1836, %v1840
        %v1843 = vadd.f32 %v1837, %v1841
        %1844 = vrot.lane.b32.xlu0 %v1842, 94
        %v1845 = vpop.permute.xlu0 %1844
        %1846 = vrot.lane.b32.xlu0 %v1843, 94
        %v1847 = vpop.permute.xlu0 %1846
        %vm1848 = vcmp.lt.s32.totalorder %v497, 94
        %v1849 = vsel %vm1848, %v1845, %v1847
        %v1850 = vsel %vm1848, %v1847, %v1845
        %s1851 = scalar_lea.vmem [#allocation7], 80
        %v1852 = vld [vmem:[%s1851] ss:$8 sm:$0x3]
        %v1854 = vlaneseq
        %v1855 = vshrl.u32 %v1854, 7
        %v1856 = vsub.s32 0, %v1855
        %v1857 = vrot.slane %v1852, %v1856
        %v1858 = vlaneseq
        %v1859 = vshrl.u32 %v1858, 7
        %v1860 = vsub.s32 1, %v1859
        %v1861 = vrot.slane %v1852, %v1860
        %v1864 = vmul.f32 %v1849, %v1857
        %v1865 = vmul.f32 %v1850, %v1861
        %v1866 = vadd.f32 %v1832, %v1864
        %v1867 = vadd.f32 %v1833, %v1865
        %s1868 = sld [smem:[#allocation6 + $0x29]]
        %v1869 = vstv %s1868
        %v1870 = vmul.f32 %v1869, %v468
        %v1871 = vmul.f32 %v1869, %v469
        %s1872 = sld [smem:[#allocation6 + $0xa9]]
        %v1873 = vstv %s1872
        %v1874 = vmul.f32 %v1873, %v475
        %v1875 = vmul.f32 %v1873, %v481
        %v1876 = vadd.f32 %v1870, %v1874
        %v1877 = vadd.f32 %v1871, %v1875
        %1878 = vrot.lane.b32.xlu0 %v1876, 93
        %v1879 = vpop.permute.xlu0 %1878
        %1880 = vrot.lane.b32.xlu0 %v1877, 93
        %v1881 = vpop.permute.xlu0 %1880
        %vm1882 = vcmp.lt.s32.totalorder %v497, 93
        %v1883 = vsel %vm1882, %v1879, %v1881
        %v1884 = vsel %vm1882, %v1881, %v1879
        %s1885 = scalar_lea.vmem [#allocation7], 81
        %v1886 = vld [vmem:[%s1885] ss:$8 sm:$0x3]
        %v1888 = vlaneseq
        %v1889 = vshrl.u32 %v1888, 7
        %v1890 = vsub.s32 0, %v1889
        %v1891 = vrot.slane %v1886, %v1890
        %v1892 = vlaneseq
        %v1893 = vshrl.u32 %v1892, 7
        %v1894 = vsub.s32 1, %v1893
        %v1895 = vrot.slane %v1886, %v1894
        %v1898 = vmul.f32 %v1883, %v1891
        %v1899 = vmul.f32 %v1884, %v1895
        %v1900 = vadd.f32 %v1866, %v1898
        %v1901 = vadd.f32 %v1867, %v1899
        %s1902 = sld [smem:[#allocation6 + $0x2a]]
        %v1903 = vstv %s1902
        %v1904 = vmul.f32 %v1903, %v468
        %v1905 = vmul.f32 %v1903, %v469
        %s1906 = sld [smem:[#allocation6 + $0xaa]]
        %v1907 = vstv %s1906
        %v1908 = vmul.f32 %v1907, %v475
        %v1909 = vmul.f32 %v1907, %v481
        %v1910 = vadd.f32 %v1904, %v1908
        %v1911 = vadd.f32 %v1905, %v1909
        %1912 = vrot.lane.b32.xlu0 %v1910, 83
        %v1913 = vpop.permute.xlu0 %1912
        %1914 = vrot.lane.b32.xlu0 %v1911, 83
        %v1915 = vpop.permute.xlu0 %1914
        %vm1916 = vcmp.lt.s32.totalorder %v497, 83
        %v1917 = vsel %vm1916, %v1913, %v1915
        %v1918 = vsel %vm1916, %v1915, %v1913
        %s1919 = scalar_lea.vmem [#allocation7], 82
        %v1920 = vld [vmem:[%s1919] ss:$8 sm:$0x3]
        %v1922 = vlaneseq
        %v1923 = vshrl.u32 %v1922, 7
        %v1924 = vsub.s32 0, %v1923
        %v1925 = vrot.slane %v1920, %v1924
        %v1926 = vlaneseq
        %v1927 = vshrl.u32 %v1926, 7
        %v1928 = vsub.s32 1, %v1927
        %v1929 = vrot.slane %v1920, %v1928
        %v1932 = vmul.f32 %v1917, %v1925
        %v1933 = vmul.f32 %v1918, %v1929
        %v1934 = vadd.f32 %v1900, %v1932
        %v1935 = vadd.f32 %v1901, %v1933
        %s1936 = sld [smem:[#allocation6 + $0x2b]]
        %v1937 = vstv %s1936
        %v1938 = vmul.f32 %v1937, %v468
        %v1939 = vmul.f32 %v1937, %v469
        %s1940 = sld [smem:[#allocation6 + $0xab]]
        %v1941 = vstv %s1940
        %v1942 = vmul.f32 %v1941, %v475
        %v1943 = vmul.f32 %v1941, %v481
        %v1944 = vadd.f32 %v1938, %v1942
        %v1945 = vadd.f32 %v1939, %v1943
        %1946 = vrot.lane.b32.xlu0 %v1944, 82
        %v1947 = vpop.permute.xlu0 %1946
        %1948 = vrot.lane.b32.xlu0 %v1945, 82
        %v1949 = vpop.permute.xlu0 %1948
        %vm1950 = vcmp.lt.s32.totalorder %v497, 82
        %v1951 = vsel %vm1950, %v1947, %v1949
        %v1952 = vsel %vm1950, %v1949, %v1947
        %s1953 = scalar_lea.vmem [#allocation7], 83
        %v1954 = vld [vmem:[%s1953] ss:$8 sm:$0x3]
        %v1956 = vlaneseq
        %v1957 = vshrl.u32 %v1956, 7
        %v1958 = vsub.s32 0, %v1957
        %v1959 = vrot.slane %v1954, %v1958
        %v1960 = vlaneseq
        %v1961 = vshrl.u32 %v1960, 7
        %v1962 = vsub.s32 1, %v1961
        %v1963 = vrot.slane %v1954, %v1962
        %v1966 = vmul.f32 %v1951, %v1959
        %v1967 = vmul.f32 %v1952, %v1963
        %v1968 = vadd.f32 %v1934, %v1966
        %v1969 = vadd.f32 %v1935, %v1967
        %s1970 = sld [smem:[#allocation6 + $0x2c]]
        %v1971 = vstv %s1970
        %v1972 = vmul.f32 %v1971, %v468
        %v1973 = vmul.f32 %v1971, %v469
        %s1974 = sld [smem:[#allocation6 + $0xac]]
        %v1975 = vstv %s1974
        %v1976 = vmul.f32 %v1975, %v475
        %v1977 = vmul.f32 %v1975, %v481
        %v1978 = vadd.f32 %v1972, %v1976
        %v1979 = vadd.f32 %v1973, %v1977
        %1980 = vrot.lane.b32.xlu0 %v1978, 81
        %v1981 = vpop.permute.xlu0 %1980
        %1982 = vrot.lane.b32.xlu0 %v1979, 81
        %v1983 = vpop.permute.xlu0 %1982
        %vm1984 = vcmp.lt.s32.totalorder %v497, 81
        %v1985 = vsel %vm1984, %v1981, %v1983
        %v1986 = vsel %vm1984, %v1983, %v1981
        %s1987 = scalar_lea.vmem [#allocation7], 84
        %v1988 = vld [vmem:[%s1987] ss:$8 sm:$0x3]
        %v1990 = vlaneseq
        %v1991 = vshrl.u32 %v1990, 7
        %v1992 = vsub.s32 0, %v1991
        %v1993 = vrot.slane %v1988, %v1992
        %v1994 = vlaneseq
        %v1995 = vshrl.u32 %v1994, 7
        %v1996 = vsub.s32 1, %v1995
        %v1997 = vrot.slane %v1988, %v1996
        %v2000 = vmul.f32 %v1985, %v1993
        %v2001 = vmul.f32 %v1986, %v1997
        %v2002 = vadd.f32 %v1968, %v2000
        %v2003 = vadd.f32 %v1969, %v2001
        %s2004 = sld [smem:[#allocation6 + $0x2d]]
        %v2005 = vstv %s2004
        %v2006 = vmul.f32 %v2005, %v468
        %v2007 = vmul.f32 %v2005, %v469
        %s2008 = sld [smem:[#allocation6 + $0xad]]
        %v2009 = vstv %s2008
        %v2010 = vmul.f32 %v2009, %v475
        %v2011 = vmul.f32 %v2009, %v481
        %v2012 = vadd.f32 %v2006, %v2010
        %v2013 = vadd.f32 %v2007, %v2011
        %2014 = vrot.lane.b32.xlu0 %v2012, 80
        %v2015 = vpop.permute.xlu0 %2014
        %2016 = vrot.lane.b32.xlu0 %v2013, 80
        %v2017 = vpop.permute.xlu0 %2016
        %vm2018 = vcmp.lt.s32.totalorder %v497, 80
        %v2019 = vsel %vm2018, %v2015, %v2017
        %v2020 = vsel %vm2018, %v2017, %v2015
        %s2021 = scalar_lea.vmem [#allocation7], 85
        %v2022 = vld [vmem:[%s2021] ss:$8 sm:$0x3]
        %v2024 = vlaneseq
        %v2025 = vshrl.u32 %v2024, 7
        %v2026 = vsub.s32 0, %v2025
        %v2027 = vrot.slane %v2022, %v2026
        %v2028 = vlaneseq
        %v2029 = vshrl.u32 %v2028, 7
        %v2030 = vsub.s32 1, %v2029
        %v2031 = vrot.slane %v2022, %v2030
        %v2034 = vmul.f32 %v2019, %v2027
        %v2035 = vmul.f32 %v2020, %v2031
        %v2036 = vadd.f32 %v2002, %v2034
        %v2037 = vadd.f32 %v2003, %v2035
        %s2038 = sld [smem:[#allocation6 + $0x2e]]
        %v2039 = vstv %s2038
        %v2040 = vmul.f32 %v2039, %v468
        %v2041 = vmul.f32 %v2039, %v469
        %s2042 = sld [smem:[#allocation6 + $0xae]]
        %v2043 = vstv %s2042
        %v2044 = vmul.f32 %v2043, %v475
        %v2045 = vmul.f32 %v2043, %v481
        %v2046 = vadd.f32 %v2040, %v2044
        %v2047 = vadd.f32 %v2041, %v2045
        %2048 = vrot.lane.b32.xlu0 %v2046, 79
        %v2049 = vpop.permute.xlu0 %2048
        %2050 = vrot.lane.b32.xlu0 %v2047, 79
        %v2051 = vpop.permute.xlu0 %2050
        %vm2052 = vcmp.lt.s32.totalorder %v497, 79
        %v2053 = vsel %vm2052, %v2049, %v2051
        %v2054 = vsel %vm2052, %v2051, %v2049
        %s2055 = scalar_lea.vmem [#allocation7], 86
        %v2056 = vld [vmem:[%s2055] ss:$8 sm:$0x3]
        %v2058 = vlaneseq
        %v2059 = vshrl.u32 %v2058, 7
        %v2060 = vsub.s32 0, %v2059
        %v2061 = vrot.slane %v2056, %v2060
        %v2062 = vlaneseq
        %v2063 = vshrl.u32 %v2062, 7
        %v2064 = vsub.s32 1, %v2063
        %v2065 = vrot.slane %v2056, %v2064
        %v2068 = vmul.f32 %v2053, %v2061
        %v2069 = vmul.f32 %v2054, %v2065
        %v2070 = vadd.f32 %v2036, %v2068
        %v2071 = vadd.f32 %v2037, %v2069
        %s2072 = sld [smem:[#allocation6 + $0x2f]]
        %v2073 = vstv %s2072
        %v2074 = vmul.f32 %v2073, %v468
        %v2075 = vmul.f32 %v2073, %v469
        %s2076 = sld [smem:[#allocation6 + $0xaf]]
        %v2077 = vstv %s2076
        %v2078 = vmul.f32 %v2077, %v475
        %v2079 = vmul.f32 %v2077, %v481
        %v2080 = vadd.f32 %v2074, %v2078
        %v2081 = vadd.f32 %v2075, %v2079
        %2082 = vrot.lane.b32.xlu0 %v2080, 78
        %v2083 = vpop.permute.xlu0 %2082
        %2084 = vrot.lane.b32.xlu0 %v2081, 78
        %v2085 = vpop.permute.xlu0 %2084
        %vm2086 = vcmp.lt.s32.totalorder %v497, 78
        %v2087 = vsel %vm2086, %v2083, %v2085
        %v2088 = vsel %vm2086, %v2085, %v2083
        %s2089 = scalar_lea.vmem [#allocation7], 87
        %v2090 = vld [vmem:[%s2089] ss:$8 sm:$0x3]
        %v2092 = vlaneseq
        %v2093 = vshrl.u32 %v2092, 7
        %v2094 = vsub.s32 0, %v2093
        %v2095 = vrot.slane %v2090, %v2094
        %v2096 = vlaneseq
        %v2097 = vshrl.u32 %v2096, 7
        %v2098 = vsub.s32 1, %v2097
        %v2099 = vrot.slane %v2090, %v2098
        %v2102 = vmul.f32 %v2087, %v2095
        %v2103 = vmul.f32 %v2088, %v2099
        %v2104 = vadd.f32 %v2070, %v2102
        %v2105 = vadd.f32 %v2071, %v2103
        %s2106 = sld [smem:[#allocation6 + $0x30]]
        %v2107 = vstv %s2106
        %v2108 = vmul.f32 %v2107, %v468
        %v2109 = vmul.f32 %v2107, %v469
        %s2110 = sld [smem:[#allocation6 + $0xb0]]
        %v2111 = vstv %s2110
        %v2112 = vmul.f32 %v2111, %v475
        %v2113 = vmul.f32 %v2111, %v481
        %v2114 = vadd.f32 %v2108, %v2112
        %v2115 = vadd.f32 %v2109, %v2113
        %2116 = vrot.lane.b32.xlu0 %v2114, 77
        %v2117 = vpop.permute.xlu0 %2116
        %2118 = vrot.lane.b32.xlu0 %v2115, 77
        %v2119 = vpop.permute.xlu0 %2118
        %vm2120 = vcmp.lt.s32.totalorder %v497, 77
        %v2121 = vsel %vm2120, %v2117, %v2119
        %v2122 = vsel %vm2120, %v2119, %v2117
        %s2123 = scalar_lea.vmem [#allocation7], 96
        %v2124 = vld [vmem:[%s2123] ss:$8 sm:$0x3]
        %v2126 = vlaneseq
        %v2127 = vshrl.u32 %v2126, 7
        %v2128 = vsub.s32 0, %v2127
        %v2129 = vrot.slane %v2124, %v2128
        %v2130 = vlaneseq
        %v2131 = vshrl.u32 %v2130, 7
        %v2132 = vsub.s32 1, %v2131
        %v2133 = vrot.slane %v2124, %v2132
        %v2136 = vmul.f32 %v2121, %v2129
        %v2137 = vmul.f32 %v2122, %v2133
        %v2138 = vadd.f32 %v2104, %v2136
        %v2139 = vadd.f32 %v2105, %v2137
        %v2140 = vxor.u32 %v2138, 2147483648
        %v2141 = vxor.u32 %v2139, 2147483648
        %v2142 = vmul.f32 %v2140, 1.442695
        %v2143 = vpow.pop %v2142
        %v2144 = vmul.f32 %v2141, 1.442695
        %v2145 = vpow.pop %v2144
        %v2146 = vadd.f32 %v2143, 1.0
        %v2147 = vadd.f32 %v2145, 1.0
        %v2148 = vrcp.pop %v2146
        %v2149 = vmul.f32 1.0, %v2148
        %v2150 = vrcp.pop %v2147
        %v2151 = vmul.f32 1.0, %v2150
        %v2152 = vlaneseq
        %v2153 = vshrl.u32 %v2152, 7
        %v2154 = vsub.s32 0, %v2153
        %v2155 = vrot.slane %v2149, %v2154
        %v2156 = vlaneseq
        %v2157 = vshrl.u32 %v2156, 7
        %v2158 = vsub.s32 0, %v2157
        %v2159 = vrot.slane %v2151, %v2158
        %v2160 = vmul.f32 %v453, %v2155
        %v2161 = vmul.f32 %v454, %v2159
        %2162 = vst [vmem:[%s269] sm:$0xff] %v2160
        %2163 = vst [vmem:[%s269 + $0x8] sm:$0xff] %v2161
        %s2164 = sand.u32 %s142, 1
        %s2165 = scalar_lea.sflag [#allocation4], %s2164
        %s2166 = sand.u32 %s142, 1
        %s2167 = smul.addr %s2166, 16
        %s2168 = scalar_lea.vmem [#allocation9], %s2167
        // Predicated region
        $region53: #{tpu_custom_call.1} parent=39 // pred_check
          %p2169 = pneg %p152
        $region54: #{tpu_custom_call.1} parent=39 // pred_check_branch
          %2171 = sbr.rel (%p2169) target = $region56
        $region55: #{tpu_custom_call.1} parent=39 // pred_region
          %s2173 = ssub.s32 256, 256
          %2174 = vsyncadd %s2165, %s2173
          %s2175 = smul.addr %s24, 2
          %s2176 = smul.addr %s2175, 128
          %s2177 = scalar_lea.hbm %s5, %s2176
          %s2179 = sshll.u32 %s2168, 4
          %s2180 = int_to_ptr.vmem [resolvable:$true] %s2179
          %2182 = dma.vmem_to_hbm [thread:$0]  %s2180, 256, %s2177, %s2165
        $region56: #{tpu_custom_call.1} parent=39 // pred_fallthru
          _
      $region40: #{tpu_custom_call.1} parent=5 // pred_fallthru
        _
      %p2183 = scmp.le.s32.totalorder 2, %s19
      // Predicated region
      $region57: #{tpu_custom_call.1} parent=5 // pred_check
        %p2184 = pneg %p2183
      $region58: #{tpu_custom_call.1} parent=5 // pred_check_branch
        %2186 = sbr.rel (%p2184) target = $region60
      $region59: #{tpu_custom_call.1} parent=5 // pred_region
        %s2187 = ssub.s32 %s19, 2
        // Predicated region
        $region61: #{tpu_custom_call.1} parent=59 // pred_check
          %p2188 = pneg %p158
        $region62: #{tpu_custom_call.1} parent=59 // pred_check_branch
          %2190 = sbr.rel (%p2188) target = $region64
        $region63: #{tpu_custom_call.1} parent=59 // pred_region
          %s2191 = sand.u32 %s143, 1
          %s2192 = scalar_lea.sflag [#allocation4], %s2191
          %s2193 = sand.u32 %s143, 1
          %s2194 = smul.addr %s2193, 16
          %s2195 = scalar_lea.vmem [#allocation9], %s2194
          %2196 = dma.done %s2192, 256
        $region64: #{tpu_custom_call.1} parent=59 // pred_fallthru
          _
      $region60: #{tpu_custom_call.1} parent=5 // pred_fallthru
        _
    $region6: #{tpu_custom_call.1} parent=1 // loop_footer
      %s23 = sadd.s32 1, %s19
    $region7: #{tpu_custom_call.1} parent=1 // loop_footer_branch
      %18 = sbr.rel target = $region3
    $region8: #{tpu_custom_call.1} parent=1 // loop_exit
      _
    %2197 = vsyncpa [#allocation3], 1
    %s2198 = scalar_lea.sflag [#allocation3], 1
    %2199 = vsyncpa %s2198, 1
    %2200 = vsyncpa [#allocation8], 1
    %2201 = vsyncpa [#allocation4], 1
    %s2202 = scalar_lea.sflag [#allocation4], 1
    %2203 = vsyncpa %s2202, 1
    %2204 = vsyncpa [#allocation5], 1
    %s2205 = scalar_lea.sflag [#allocation5], 1
    %2206 = vsyncpa %s2205, 1

</llo_original>
